<compile_context>
chip_gen: v7x
topology: tpu7x:2x2x1
jax: 0.10.0
libtpu: 0.0.40
codegen_flags: <defaults>
</compile_context>

<pallas_src>
import functools
import math

import numpy as np
import jax
import jax.numpy as jnp
from jax.experimental import pallas as pl
from jax.experimental.pallas import tpu as pltpu

BN_EPS = 1e-5


# ----------------------------------------------------------------------------
# The single fused Pallas kernel: whole Down_resnet forward in one grid step.
# ----------------------------------------------------------------------------
def _down_resnet_kernel(a_ref, msk_ref, wd_ref, bd_ref, w1_ref, b1_ref,
                        wbr_ref, bbr_ref, o_ref,
                        *, nblocks, nums, scale, width, Ho, Wo, M):
    """Layout: channels on sublanes, flattened (batch, y, x) on lanes.

    a_ref   : (4*Cin, M)      2x2/s2 im2col of the input, M = B*Ho*Wo
    msk_ref : (9, M)          per-tap source-validity masks for the 3x3 halo
    wd_ref  : (C, 4*Cin)      BN-folded down-conv weight;  bd_ref : (C, 1)
    w1_ref  : (nblocks*C, C)                               b1_ref : (nblocks*C, 1)
    wbr_ref : (nblocks*nums*width, 9*width)                bbr_ref: (.., 1)
    o_ref   : (C, M)          channel-major output, C = width*scale
    """
    C = width * scale

    # ---- 2x2 stride-2 down conv + folded BN + ReLU: one lane-dense matmul ---
    cur = jnp.maximum(
        jnp.dot(wd_ref[...], a_ref[...], preferred_element_type=jnp.float32)
        + bd_ref[...], 0.0)                                       # (C, M)

    # ---- Res2net backbone blocks: all intermediates stay in vregs -----------
    for blk in range(nblocks):
        w1 = w1_ref[blk * C:(blk + 1) * C, :]                     # (C, C)
        b1 = b1_ref[blk * C:(blk + 1) * C, :]                     # (C, 1)
        out1 = jnp.maximum(
            jnp.dot(w1, cur, preferred_element_type=jnp.float32) + b1, 0.0)

        parts = []
        sp = None
        for i in range(nums):
            spx_i = out1[i * width:(i + 1) * width, :]            # (width, M)
            sp = spx_i if i == 0 else sp + spx_i

            # In-register im2col for the 3x3 / pad=1 conv: 9 lane rotations
            # (XLU) + boundary masks (VPU) stacked on sublanes, then ONE MXU
            # contraction with K = 9*width instead of 9 tiny K=width matmuls.
            rows = []
            for t in range(9):
                dy, dx = t // 3 - 1, t % 3 - 1
                s = dy * Wo + dx                                  # flat-lane shift
                if s == 0:
                    rows.append(sp)                               # center tap
                else:
                    shifted = pltpu.roll(sp, (-s) % M, axis=1)    # out[m]=in[m+s]
                    rows.append(shifted * msk_ref[t:t + 1, :])
            patch = jnp.concatenate(rows, axis=0)                 # (9*width, M)

            r0 = (blk * nums + i) * width
            sp = jnp.maximum(
                jnp.dot(wbr_ref[r0:r0 + width, :], patch,
                        preferred_element_type=jnp.float32)
                + bbr_ref[r0:r0 + width, :], 0.0)                 # folded BN+ReLU
            parts.append(sp)

        if scale != 1:                      # last split group passes through
            parts.append(out1[nums * width:scale * width, :])

        # TODO(synk): ESA_blcok is not defined in the reference source; the
        # PyTorch `out = self.esa(residual, out)` is treated as identity on out.
        cur = jnp.concatenate(parts, axis=0)                      # (C, M)

    o_ref[...] = cur


# ----------------------------------------------------------------------------
# Parameter packing: fold BN (eval mode) into the conv weights, dense 2-D slabs
# ----------------------------------------------------------------------------
def _fold_bn(bn):
    gamma, beta, mean, var = bn
    s = gamma / jnp.sqrt(var + BN_EPS)
    return s, beta - mean * s


def pack_params(params, scale):
    nums = 1 if scale == 1 else scale - 1
    width = params["blocks"][0]["width"]

    sd, cd = _fold_bn(params["down_bn"])
    wd = params["down_conv_w"]                                    # (O, I, 2, 2)
    O, I, kh, kw = wd.shape
    wd2 = jnp.transpose(wd, (0, 2, 3, 1)).reshape(O, kh * kw * I) * sd[:, None]

    w1s, b1s, wbrs, bbrs = [], [], [], []
    for blk in params["blocks"]:
        s1, c1 = _fold_bn(blk["bn1"])
        w1s.append(blk["conv1_w"][:, :, 0, 0] * s1[:, None])      # (C, C)
        b1s.append(c1.reshape(-1, 1))
        for i in range(nums):
            si, ci = _fold_bn(blk["bns"][i])
            w = blk["convs_w"][i]                                 # (width, width, 3, 3)
            wbrs.append(jnp.transpose(w, (0, 2, 3, 1)).reshape(width, 9 * width)
                        * si[:, None])
            bbrs.append(ci.reshape(-1, 1))

    return dict(
        wd=wd2, bd=cd.reshape(-1, 1),
        w1=jnp.concatenate(w1s, axis=0), b1=jnp.concatenate(b1s, axis=0),
        wbr=jnp.concatenate(wbrs, axis=0), bbr=jnp.concatenate(bbrs, axis=0),
        width=width, nums=nums, scale=scale, nblocks=len(params["blocks"]),
    )


# ----------------------------------------------------------------------------
# Forward wrapper (NCHW in / NCHW out, single pallas_call, no grid)
# ----------------------------------------------------------------------------
def down_resnet_forward(x_nchw, packed):
    B, Cin, H, W = x_nchw.shape
    Ho, Wo = H // 2, W // 2
    M = B * Ho * Wo
    C = packed["wd"].shape[0]
    width, nums, scale = packed["width"], packed["nums"], packed["scale"]
    nblocks = packed["nblocks"]

    # 2x2/stride-2 im2col (a pure, non-expanding relayout) that also moves the
    # data into the kernel's channels-on-sublanes / spatial-on-lanes layout.
    a = x_nchw.reshape(B, Cin, Ho, 2, Wo, 2)
    a = jnp.transpose(a, (3, 5, 1, 0, 2, 4)).reshape(4 * Cin, M)

    # Static per-tap source-validity masks for the 3x3/pad=1 conv (f32 0/1);
    # batch boundaries coincide with image boundaries, so these masks also keep
    # the lane rolls from leaking between batch elements.
    yy, xx = np.meshgrid(np.arange(Ho), np.arange(Wo), indexing="ij")
    masks = np.empty((9, M), np.float32)
    for t in range(9):
        dy, dx = t // 3 - 1, t % 3 - 1
        valid = ((yy + dy >= 0) & (yy + dy < Ho)
                 & (xx + dx >= 0) & (xx + dx < Wo))
        masks[t] = np.tile(valid.reshape(-1).astype(np.float32), B)
    masks = jnp.asarray(masks)

    kernel = functools.partial(_down_resnet_kernel, nblocks=nblocks, nums=nums,
                               scale=scale, width=width, Ho=Ho, Wo=Wo, M=M)

    # Single grid step: whole-array VMEM blocks, batch folded into the lane dim.
    y = pl.pallas_call(
        kernel,
        out_shape=jax.ShapeDtypeStruct((C, M), jnp.float32),
    )(a, masks, packed["wd"], packed["bd"], packed["w1"], packed["b1"],
      packed["wbr"], packed["bbr"])

    # (C, B*Ho*Wo) -> NCHW: lanes are already (b, y, x)-ordered, so only the
    # tiny batch/channel swap remains (16 KB relayout).
    return jnp.transpose(y.reshape(C, B, Ho, Wo), (1, 0, 2, 3))


# ----------------------------------------------------------------------------
# Deterministic parameter initialization (shapes follow the PyTorch __init__)
# ----------------------------------------------------------------------------
def init_params(key, in_channels, out_channels, baseWidth, init_feature, scale, blocks):
    key_iter = iter(jax.random.split(key, 512))
    nxt = lambda: next(key_iter)

    def conv_w(o, i, kh, kw):
        bound = 1.0 / math.sqrt(i * kh * kw)
        return jax.random.uniform(nxt(), (o, i, kh, kw), jnp.float32, -bound, bound)

    def bn(c):
        gamma = jax.random.uniform(nxt(), (c,), jnp.float32, 0.5, 1.5)
        beta = 0.1 * jax.random.normal(nxt(), (c,), jnp.float32)
        mean = 0.1 * jax.random.normal(nxt(), (c,), jnp.float32)
        var = jax.random.uniform(nxt(), (c,), jnp.float32, 0.5, 1.5)
        return (gamma, beta, mean, var)

    width = int(math.floor(out_channels * (baseWidth / init_feature)))
    # With ESA skipped, chaining blocks requires width*scale == out_channels.
    assert width * scale == out_channels, (width, scale, out_channels)
    nums = 1 if scale == 1 else scale - 1

    params = {
        "down_conv_w": conv_w(out_channels, in_channels, 2, 2),
        "down_bn": bn(out_channels),
        "blocks": [],
    }
    for _ in range(blocks):
        params["blocks"].append({
            "width": width,
            "conv1_w": conv_w(width * scale, out_channels, 1, 1),
            "bn1": bn(width * scale),
            "convs_w": [conv_w(width, width, 3, 3) for _ in range(nums)],
            "bns": [bn(width) for _ in range(nums)],
        })
    return params


# ----------------------------------------------------------------------------
# Pure-JAX reference (eval-mode BN, ESA treated as identity) for validation
# ----------------------------------------------------------------------------
def _conv_nchw(x, w, stride, pad):
    return jax.lax.conv_general_dilated(
        x, w, window_strides=(stride, stride), padding=[(pad, pad), (pad, pad)],
        dimension_numbers=("NCHW", "OIHW", "NCHW"),
        precision=jax.lax.Precision.HIGHEST)


def _bn_relu_ref(x, bn):
    gamma, beta, mean, var = bn
    s = gamma / jnp.sqrt(var + BN_EPS)
    b = beta - mean * s
    return jnp.maximum(x * s[None, :, None, None] + b[None, :, None, None], 0.0)


def reference_forward(x, params, scale):
    width = params["blocks"][0]["width"]
    nums = 1 if scale == 1 else scale - 1
    y = _bn_relu_ref(_conv_nchw(x, params["down_conv_w"], 2, 0), params["down_bn"])
    for blk in params["blocks"]:
        out = _bn_relu_ref(_conv_nchw(y, blk["conv1_w"], 1, 0), blk["bn1"])
        spx = [out[:, i * width:(i + 1) * width] for i in range(scale)]
        parts, sp = [], None
        for i in range(nums):
            sp = spx[i] if i == 0 else sp + spx[i]
            sp = _bn_relu_ref(_conv_nchw(sp, blk["convs_w"][i], 1, 1), blk["bns"][i])
            parts.append(sp)
        if scale != 1:
            parts.append(spx[nums])
        y = jnp.concatenate(parts, axis=1)   # ESA treated as identity
    return y


# ----------------------------------------------------------------------------
if __name__ == "__main__":
    # Module config: Down_resnet(dim=16, in_channels=4, out_channels=16,
    #                            baseWidth=1, init_feature=4, scale=4, blocks=2)
    in_channels, out_channels = 4, 16
    baseWidth, init_feature, scale, blocks = 1, 4, 4, 2

    key = jax.random.PRNGKey(0)
    kp, kx = jax.random.split(key)
    params = init_params(kp, in_channels, out_channels, baseWidth, init_feature,
                         scale, blocks)
    packed = pack_params(params, scale)          # BN folded once, outside jit

    x = jax.random.normal(kx, (2, in_channels, 16, 16), jnp.float32)     # NCHW

    fwd = jax.jit(lambda xx: down_resnet_forward(xx, packed))
    y = fwd(x)
    jax.block_until_ready(y)

    # 2x2/stride-2 downsample: spatial 16 -> 8; channels -> out_channels
    assert y.shape == (2, out_channels, 8, 8), y.shape
    assert bool(jnp.all(jnp.isfinite(y)))

    # Numerical check against a pure-JAX (XLA conv, HIGHEST precision) reference.
    # Tolerance tightened 4x vs. the previous version; kept at 5e-3 (not 1e-5)
    # only to stay robust to the MXU's internal f32 multi-pass rounding --
    # any packing/layout bug produces O(1) differences and is still caught.
    y_ref = reference_forward(x, params, scale)
    assert bool(jnp.allclose(y, y_ref, atol=5e-3, rtol=5e-3)), (
        "max abs diff", float(jnp.max(jnp.abs(y - y_ref))))

    print("KERNEL_OK")
</pallas_src>

<mosaic_0001>
module attributes {stable_mosaic.version = 11 : i64} {
  func.func @_down_resnet_kernel(%arg0: memref<16x128xf32, #tpu.memory_space<vmem>>, %arg1: memref<9x128xf32, #tpu.memory_space<vmem>>, %arg2: memref<16x16xf32, #tpu.memory_space<vmem>>, %arg3: memref<16x1xf32, #tpu.memory_space<vmem>>, %arg4: memref<32x16xf32, #tpu.memory_space<vmem>>, %arg5: memref<32x1xf32, #tpu.memory_space<vmem>>, %arg6: memref<24x36xf32, #tpu.memory_space<vmem>>, %arg7: memref<24x1xf32, #tpu.memory_space<vmem>>, %arg8: memref<16x128xf32, #tpu.memory_space<vmem>>) attributes {dimension_semantics = [], scalar_prefetch = 0 : i64, scratch_operands = 0 : i64, tpu.core_type = #tpu.core_type<tc>} {
    %c0 = arith.constant 0 : index
    %c0_0 = arith.constant 0 : index
    %0 = vector.load %arg2[%c0, %c0_0] : memref<16x16xf32, #tpu.memory_space<vmem>>, vector<16x16xf32>
    %c0_1 = arith.constant 0 : index
    %c0_2 = arith.constant 0 : index
    %1 = vector.load %arg0[%c0_1, %c0_2] : memref<16x128xf32, #tpu.memory_space<vmem>>, vector<16x128xf32>
    %cst = arith.constant dense<0.000000e+00> : vector<16x128xf32>
    %2 = tpu.matmul %0, %1, %cst {dimension_numbers = #tpu.dot_dimension_numbers<[1], [0], [0], [1], [0, 0, 1, 1], [], []>} : vector<16x16xf32>, vector<16x128xf32>, vector<16x128xf32> -> vector<16x128xf32>
    %c0_3 = arith.constant 0 : index
    %c0_4 = arith.constant 0 : index
    %3 = vector.load %arg3[%c0_3, %c0_4] : memref<16x1xf32, #tpu.memory_space<vmem>>, vector<16x1xf32>
    %4 = vector.broadcast %3 : vector<16x1xf32> to vector<16x128xf32>
    %5 = arith.addf %2, %4 : vector<16x128xf32>
    %cst_5 = arith.constant 0.000000e+00 : f32
    %6 = vector.broadcast %cst_5 : f32 to vector<16x128xf32>
    %7 = arith.maximumf %5, %6 : vector<16x128xf32>
    %c0_6 = arith.constant 0 : index
    %c0_7 = arith.constant 0 : index
    %8 = vector.load %arg4[%c0_6, %c0_7] : memref<32x16xf32, #tpu.memory_space<vmem>>, vector<16x16xf32>
    %c0_8 = arith.constant 0 : index
    %c0_9 = arith.constant 0 : index
    %9 = vector.load %arg5[%c0_8, %c0_9] : memref<32x1xf32, #tpu.memory_space<vmem>>, vector<16x1xf32>
    %cst_10 = arith.constant dense<0.000000e+00> : vector<16x128xf32>
    %10 = tpu.matmul %8, %7, %cst_10 {dimension_numbers = #tpu.dot_dimension_numbers<[1], [0], [0], [1], [0, 0, 1, 1], [], []>} : vector<16x16xf32>, vector<16x128xf32>, vector<16x128xf32> -> vector<16x128xf32>
    %11 = vector.broadcast %9 : vector<16x1xf32> to vector<16x128xf32>
    %12 = arith.addf %10, %11 : vector<16x128xf32>
    %cst_11 = arith.constant 0.000000e+00 : f32
    %13 = vector.broadcast %cst_11 : f32 to vector<16x128xf32>
    %14 = arith.maximumf %12, %13 : vector<16x128xf32>
    %15 = vector.extract_strided_slice %14 {offsets = [0, 0], sizes = [4, 128], strides = [1, 1]} : vector<16x128xf32> to vector<4x128xf32>
    %c9_i32 = arith.constant 9 : i32
    %16 = tpu.dynamic_rotate %15 by %c9_i32 dim 1 : vector<4x128xf32>, i32 -> vector<4x128xf32>
    %c0_12 = arith.constant 0 : index
    %c0_13 = arith.constant 0 : index
    %17 = vector.load %arg1[%c0_12, %c0_13] : memref<9x128xf32, #tpu.memory_space<vmem>>, vector<1x128xf32>
    %18 = vector.broadcast %17 : vector<1x128xf32> to vector<4x128xf32>
    %19 = arith.mulf %16, %18 : vector<4x128xf32>
    %c8_i32 = arith.constant 8 : i32
    %20 = tpu.dynamic_rotate %15 by %c8_i32 dim 1 : vector<4x128xf32>, i32 -> vector<4x128xf32>
    %c1 = arith.constant 1 : index
    %c0_14 = arith.constant 0 : index
    %21 = vector.load %arg1[%c1, %c0_14] : memref<9x128xf32, #tpu.memory_space<vmem>>, vector<1x128xf32>
    %22 = vector.broadcast %21 : vector<1x128xf32> to vector<4x128xf32>
    %23 = arith.mulf %20, %22 : vector<4x128xf32>
    %c7_i32 = arith.constant 7 : i32
    %24 = tpu.dynamic_rotate %15 by %c7_i32 dim 1 : vector<4x128xf32>, i32 -> vector<4x128xf32>
    %c2 = arith.constant 2 : index
    %c0_15 = arith.constant 0 : index
    %25 = vector.load %arg1[%c2, %c0_15] : memref<9x128xf32, #tpu.memory_space<vmem>>, vector<1x128xf32>
    %26 = vector.broadcast %25 : vector<1x128xf32> to vector<4x128xf32>
    %27 = arith.mulf %24, %26 : vector<4x128xf32>
    %c1_i32 = arith.constant 1 : i32
    %28 = tpu.dynamic_rotate %15 by %c1_i32 dim 1 : vector<4x128xf32>, i32 -> vector<4x128xf32>
    %c3 = arith.constant 3 : index
    %c0_16 = arith.constant 0 : index
    %29 = vector.load %arg1[%c3, %c0_16] : memref<9x128xf32, #tpu.memory_space<vmem>>, vector<1x128xf32>
    %30 = vector.broadcast %29 : vector<1x128xf32> to vector<4x128xf32>
    %31 = arith.mulf %28, %30 : vector<4x128xf32>
    %c127_i32 = arith.constant 127 : i32
    %32 = tpu.dynamic_rotate %15 by %c127_i32 dim 1 : vector<4x128xf32>, i32 -> vector<4x128xf32>
    %c5 = arith.constant 5 : index
    %c0_17 = arith.constant 0 : index
    %33 = vector.load %arg1[%c5, %c0_17] : memref<9x128xf32, #tpu.memory_space<vmem>>, vector<1x128xf32>
    %34 = vector.broadcast %33 : vector<1x128xf32> to vector<4x128xf32>
    %35 = arith.mulf %32, %34 : vector<4x128xf32>
    %c121_i32 = arith.constant 121 : i32
    %36 = tpu.dynamic_rotate %15 by %c121_i32 dim 1 : vector<4x128xf32>, i32 -> vector<4x128xf32>
    %c6 = arith.constant 6 : index
    %c0_18 = arith.constant 0 : index
    %37 = vector.load %arg1[%c6, %c0_18] : memref<9x128xf32, #tpu.memory_space<vmem>>, vector<1x128xf32>
    %38 = vector.broadcast %37 : vector<1x128xf32> to vector<4x128xf32>
    %39 = arith.mulf %36, %38 : vector<4x128xf32>
    %c120_i32 = arith.constant 120 : i32
    %40 = tpu.dynamic_rotate %15 by %c120_i32 dim 1 : vector<4x128xf32>, i32 -> vector<4x128xf32>
    %c7 = arith.constant 7 : index
    %c0_19 = arith.constant 0 : index
    %41 = vector.load %arg1[%c7, %c0_19] : memref<9x128xf32, #tpu.memory_space<vmem>>, vector<1x128xf32>
    %42 = vector.broadcast %41 : vector<1x128xf32> to vector<4x128xf32>
    %43 = arith.mulf %40, %42 : vector<4x128xf32>
    %c119_i32 = arith.constant 119 : i32
    %44 = tpu.dynamic_rotate %15 by %c119_i32 dim 1 : vector<4x128xf32>, i32 -> vector<4x128xf32>
    %c8 = arith.constant 8 : index
    %c0_20 = arith.constant 0 : index
    %45 = vector.load %arg1[%c8, %c0_20] : memref<9x128xf32, #tpu.memory_space<vmem>>, vector<1x128xf32>
    %46 = vector.broadcast %45 : vector<1x128xf32> to vector<4x128xf32>
    %47 = arith.mulf %44, %46 : vector<4x128xf32>
    %48 = tpu.concatenate %19, %23, %27, %31, %15, %35, %39, %43, %47 in 0 : vector<4x128xf32>, vector<4x128xf32>, vector<4x128xf32>, vector<4x128xf32>, vector<4x128xf32>, vector<4x128xf32>, vector<4x128xf32>, vector<4x128xf32>, vector<4x128xf32> -> vector<36x128xf32>
    %c0_21 = arith.constant 0 : index
    %c0_22 = arith.constant 0 : index
    %49 = vector.load %arg6[%c0_21, %c0_22] : memref<24x36xf32, #tpu.memory_space<vmem>>, vector<4x36xf32>
    %cst_23 = arith.constant dense<0.000000e+00> : vector<4x128xf32>
    %50 = tpu.matmul %49, %48, %cst_23 {dimension_numbers = #tpu.dot_dimension_numbers<[1], [0], [0], [1], [0, 0, 1, 1], [], []>} : vector<4x36xf32>, vector<36x128xf32>, vector<4x128xf32> -> vector<4x128xf32>
    %c0_24 = arith.constant 0 : index
    %c0_25 = arith.constant 0 : index
    %51 = vector.load %arg7[%c0_24, %c0_25] : memref<24x1xf32, #tpu.memory_space<vmem>>, vector<4x1xf32>
    %52 = vector.broadcast %51 : vector<4x1xf32> to vector<4x128xf32>
    %53 = arith.addf %50, %52 : vector<4x128xf32>
    %cst_26 = arith.constant 0.000000e+00 : f32
    %54 = vector.broadcast %cst_26 : f32 to vector<4x128xf32>
    %55 = arith.maximumf %53, %54 : vector<4x128xf32>
    %56 = vector.extract_strided_slice %14 {offsets = [4, 0], sizes = [4, 128], strides = [1, 1]} : vector<16x128xf32> to vector<4x128xf32>
    %57 = arith.addf %55, %56 : vector<4x128xf32>
    %c9_i32_27 = arith.constant 9 : i32
    %58 = tpu.dynamic_rotate %57 by %c9_i32_27 dim 1 : vector<4x128xf32>, i32 -> vector<4x128xf32>
    %c0_28 = arith.constant 0 : index
    %c0_29 = arith.constant 0 : index
    %59 = vector.load %arg1[%c0_28, %c0_29] : memref<9x128xf32, #tpu.memory_space<vmem>>, vector<1x128xf32>
    %60 = vector.broadcast %59 : vector<1x128xf32> to vector<4x128xf32>
    %61 = arith.mulf %58, %60 : vector<4x128xf32>
    %c8_i32_30 = arith.constant 8 : i32
    %62 = tpu.dynamic_rotate %57 by %c8_i32_30 dim 1 : vector<4x128xf32>, i32 -> vector<4x128xf32>
    %c1_31 = arith.constant 1 : index
    %c0_32 = arith.constant 0 : index
    %63 = vector.load %arg1[%c1_31, %c0_32] : memref<9x128xf32, #tpu.memory_space<vmem>>, vector<1x128xf32>
    %64 = vector.broadcast %63 : vector<1x128xf32> to vector<4x128xf32>
    %65 = arith.mulf %62, %64 : vector<4x128xf32>
    %c7_i32_33 = arith.constant 7 : i32
    %66 = tpu.dynamic_rotate %57 by %c7_i32_33 dim 1 : vector<4x128xf32>, i32 -> vector<4x128xf32>
    %c2_34 = arith.constant 2 : index
    %c0_35 = arith.constant 0 : index
    %67 = vector.load %arg1[%c2_34, %c0_35] : memref<9x128xf32, #tpu.memory_space<vmem>>, vector<1x128xf32>
    %68 = vector.broadcast %67 : vector<1x128xf32> to vector<4x128xf32>
    %69 = arith.mulf %66, %68 : vector<4x128xf32>
    %c1_i32_36 = arith.constant 1 : i32
    %70 = tpu.dynamic_rotate %57 by %c1_i32_36 dim 1 : vector<4x128xf32>, i32 -> vector<4x128xf32>
    %c3_37 = arith.constant 3 : index
    %c0_38 = arith.constant 0 : index
    %71 = vector.load %arg1[%c3_37, %c0_38] : memref<9x128xf32, #tpu.memory_space<vmem>>, vector<1x128xf32>
    %72 = vector.broadcast %71 : vector<1x128xf32> to vector<4x128xf32>
    %73 = arith.mulf %70, %72 : vector<4x128xf32>
    %c127_i32_39 = arith.constant 127 : i32
    %74 = tpu.dynamic_rotate %57 by %c127_i32_39 dim 1 : vector<4x128xf32>, i32 -> vector<4x128xf32>
    %c5_40 = arith.constant 5 : index
    %c0_41 = arith.constant 0 : index
    %75 = vector.load %arg1[%c5_40, %c0_41] : memref<9x128xf32, #tpu.memory_space<vmem>>, vector<1x128xf32>
    %76 = vector.broadcast %75 : vector<1x128xf32> to vector<4x128xf32>
    %77 = arith.mulf %74, %76 : vector<4x128xf32>
    %c121_i32_42 = arith.constant 121 : i32
    %78 = tpu.dynamic_rotate %57 by %c121_i32_42 dim 1 : vector<4x128xf32>, i32 -> vector<4x128xf32>
    %c6_43 = arith.constant 6 : index
    %c0_44 = arith.constant 0 : index
    %79 = vector.load %arg1[%c6_43, %c0_44] : memref<9x128xf32, #tpu.memory_space<vmem>>, vector<1x128xf32>
    %80 = vector.broadcast %79 : vector<1x128xf32> to vector<4x128xf32>
    %81 = arith.mulf %78, %80 : vector<4x128xf32>
    %c120_i32_45 = arith.constant 120 : i32
    %82 = tpu.dynamic_rotate %57 by %c120_i32_45 dim 1 : vector<4x128xf32>, i32 -> vector<4x128xf32>
    %c7_46 = arith.constant 7 : index
    %c0_47 = arith.constant 0 : index
    %83 = vector.load %arg1[%c7_46, %c0_47] : memref<9x128xf32, #tpu.memory_space<vmem>>, vector<1x128xf32>
    %84 = vector.broadcast %83 : vector<1x128xf32> to vector<4x128xf32>
    %85 = arith.mulf %82, %84 : vector<4x128xf32>
    %c119_i32_48 = arith.constant 119 : i32
    %86 = tpu.dynamic_rotate %57 by %c119_i32_48 dim 1 : vector<4x128xf32>, i32 -> vector<4x128xf32>
    %c8_49 = arith.constant 8 : index
    %c0_50 = arith.constant 0 : index
    %87 = vector.load %arg1[%c8_49, %c0_50] : memref<9x128xf32, #tpu.memory_space<vmem>>, vector<1x128xf32>
    %88 = vector.broadcast %87 : vector<1x128xf32> to vector<4x128xf32>
    %89 = arith.mulf %86, %88 : vector<4x128xf32>
    %90 = tpu.concatenate %61, %65, %69, %73, %57, %77, %81, %85, %89 in 0 : vector<4x128xf32>, vector<4x128xf32>, vector<4x128xf32>, vector<4x128xf32>, vector<4x128xf32>, vector<4x128xf32>, vector<4x128xf32>, vector<4x128xf32>, vector<4x128xf32> -> vector<36x128xf32>
    %c4 = arith.constant 4 : index
    %c0_51 = arith.constant 0 : index
    %91 = vector.load %arg6[%c4, %c0_51] : memref<24x36xf32, #tpu.memory_space<vmem>>, vector<4x36xf32>
    %cst_52 = arith.constant dense<0.000000e+00> : vector<4x128xf32>
    %92 = tpu.matmul %91, %90, %cst_52 {dimension_numbers = #tpu.dot_dimension_numbers<[1], [0], [0], [1], [0, 0, 1, 1], [], []>} : vector<4x36xf32>, vector<36x128xf32>, vector<4x128xf32> -> vector<4x128xf32>
    %c4_53 = arith.constant 4 : index
    %c0_54 = arith.constant 0 : index
    %93 = vector.load %arg7[%c4_53, %c0_54] : memref<24x1xf32, #tpu.memory_space<vmem>>, vector<4x1xf32>
    %94 = vector.broadcast %93 : vector<4x1xf32> to vector<4x128xf32>
    %95 = arith.addf %92, %94 : vector<4x128xf32>
    %cst_55 = arith.constant 0.000000e+00 : f32
    %96 = vector.broadcast %cst_55 : f32 to vector<4x128xf32>
    %97 = arith.maximumf %95, %96 : vector<4x128xf32>
    %98 = vector.extract_strided_slice %14 {offsets = [8, 0], sizes = [4, 128], strides = [1, 1]} : vector<16x128xf32> to vector<4x128xf32>
    %99 = arith.addf %97, %98 : vector<4x128xf32>
    %c9_i32_56 = arith.constant 9 : i32
    %100 = tpu.dynamic_rotate %99 by %c9_i32_56 dim 1 : vector<4x128xf32>, i32 -> vector<4x128xf32>
    %c0_57 = arith.constant 0 : index
    %c0_58 = arith.constant 0 : index
    %101 = vector.load %arg1[%c0_57, %c0_58] : memref<9x128xf32, #tpu.memory_space<vmem>>, vector<1x128xf32>
    %102 = vector.broadcast %101 : vector<1x128xf32> to vector<4x128xf32>
    %103 = arith.mulf %100, %102 : vector<4x128xf32>
    %c8_i32_59 = arith.constant 8 : i32
    %104 = tpu.dynamic_rotate %99 by %c8_i32_59 dim 1 : vector<4x128xf32>, i32 -> vector<4x128xf32>
    %c1_60 = arith.constant 1 : index
    %c0_61 = arith.constant 0 : index
    %105 = vector.load %arg1[%c1_60, %c0_61] : memref<9x128xf32, #tpu.memory_space<vmem>>, vector<1x128xf32>
    %106 = vector.broadcast %105 : vector<1x128xf32> to vector<4x128xf32>
    %107 = arith.mulf %104, %106 : vector<4x128xf32>
    %c7_i32_62 = arith.constant 7 : i32
    %108 = tpu.dynamic_rotate %99 by %c7_i32_62 dim 1 : vector<4x128xf32>, i32 -> vector<4x128xf32>
    %c2_63 = arith.constant 2 : index
    %c0_64 = arith.constant 0 : index
    %109 = vector.load %arg1[%c2_63, %c0_64] : memref<9x128xf32, #tpu.memory_space<vmem>>, vector<1x128xf32>
    %110 = vector.broadcast %109 : vector<1x128xf32> to vector<4x128xf32>
    %111 = arith.mulf %108, %110 : vector<4x128xf32>
    %c1_i32_65 = arith.constant 1 : i32
    %112 = tpu.dynamic_rotate %99 by %c1_i32_65 dim 1 : vector<4x128xf32>, i32 -> vector<4x128xf32>
    %c3_66 = arith.constant 3 : index
    %c0_67 = arith.constant 0 : index
    %113 = vector.load %arg1[%c3_66, %c0_67] : memref<9x128xf32, #tpu.memory_space<vmem>>, vector<1x128xf32>
    %114 = vector.broadcast %113 : vector<1x128xf32> to vector<4x128xf32>
    %115 = arith.mulf %112, %114 : vector<4x128xf32>
    %c127_i32_68 = arith.constant 127 : i32
    %116 = tpu.dynamic_rotate %99 by %c127_i32_68 dim 1 : vector<4x128xf32>, i32 -> vector<4x128xf32>
    %c5_69 = arith.constant 5 : index
    %c0_70 = arith.constant 0 : index
    %117 = vector.load %arg1[%c5_69, %c0_70] : memref<9x128xf32, #tpu.memory_space<vmem>>, vector<1x128xf32>
    %118 = vector.broadcast %117 : vector<1x128xf32> to vector<4x128xf32>
    %119 = arith.mulf %116, %118 : vector<4x128xf32>
    %c121_i32_71 = arith.constant 121 : i32
    %120 = tpu.dynamic_rotate %99 by %c121_i32_71 dim 1 : vector<4x128xf32>, i32 -> vector<4x128xf32>
    %c6_72 = arith.constant 6 : index
    %c0_73 = arith.constant 0 : index
    %121 = vector.load %arg1[%c6_72, %c0_73] : memref<9x128xf32, #tpu.memory_space<vmem>>, vector<1x128xf32>
    %122 = vector.broadcast %121 : vector<1x128xf32> to vector<4x128xf32>
    %123 = arith.mulf %120, %122 : vector<4x128xf32>
    %c120_i32_74 = arith.constant 120 : i32
    %124 = tpu.dynamic_rotate %99 by %c120_i32_74 dim 1 : vector<4x128xf32>, i32 -> vector<4x128xf32>
    %c7_75 = arith.constant 7 : index
    %c0_76 = arith.constant 0 : index
    %125 = vector.load %arg1[%c7_75, %c0_76] : memref<9x128xf32, #tpu.memory_space<vmem>>, vector<1x128xf32>
    %126 = vector.broadcast %125 : vector<1x128xf32> to vector<4x128xf32>
    %127 = arith.mulf %124, %126 : vector<4x128xf32>
    %c119_i32_77 = arith.constant 119 : i32
    %128 = tpu.dynamic_rotate %99 by %c119_i32_77 dim 1 : vector<4x128xf32>, i32 -> vector<4x128xf32>
    %c8_78 = arith.constant 8 : index
    %c0_79 = arith.constant 0 : index
    %129 = vector.load %arg1[%c8_78, %c0_79] : memref<9x128xf32, #tpu.memory_space<vmem>>, vector<1x128xf32>
    %130 = vector.broadcast %129 : vector<1x128xf32> to vector<4x128xf32>
    %131 = arith.mulf %128, %130 : vector<4x128xf32>
    %132 = tpu.concatenate %103, %107, %111, %115, %99, %119, %123, %127, %131 in 0 : vector<4x128xf32>, vector<4x128xf32>, vector<4x128xf32>, vector<4x128xf32>, vector<4x128xf32>, vector<4x128xf32>, vector<4x128xf32>, vector<4x128xf32>, vector<4x128xf32> -> vector<36x128xf32>
    %c8_80 = arith.constant 8 : index
    %c0_81 = arith.constant 0 : index
    %133 = vector.load %arg6[%c8_80, %c0_81] : memref<24x36xf32, #tpu.memory_space<vmem>>, vector<4x36xf32>
    %cst_82 = arith.constant dense<0.000000e+00> : vector<4x128xf32>
    %134 = tpu.matmul %133, %132, %cst_82 {dimension_numbers = #tpu.dot_dimension_numbers<[1], [0], [0], [1], [0, 0, 1, 1], [], []>} : vector<4x36xf32>, vector<36x128xf32>, vector<4x128xf32> -> vector<4x128xf32>
    %c8_83 = arith.constant 8 : index
    %c0_84 = arith.constant 0 : index
    %135 = vector.load %arg7[%c8_83, %c0_84] : memref<24x1xf32, #tpu.memory_space<vmem>>, vector<4x1xf32>
    %136 = vector.broadcast %135 : vector<4x1xf32> to vector<4x128xf32>
    %137 = arith.addf %134, %136 : vector<4x128xf32>
    %cst_85 = arith.constant 0.000000e+00 : f32
    %138 = vector.broadcast %cst_85 : f32 to vector<4x128xf32>
    %139 = arith.maximumf %137, %138 : vector<4x128xf32>
    %140 = vector.extract_strided_slice %14 {offsets = [12, 0], sizes = [4, 128], strides = [1, 1]} : vector<16x128xf32> to vector<4x128xf32>
    %141 = tpu.concatenate %55, %97, %139, %140 in 0 : vector<4x128xf32>, vector<4x128xf32>, vector<4x128xf32>, vector<4x128xf32> -> vector<16x128xf32>
    %c16 = arith.constant 16 : index
    %c0_86 = arith.constant 0 : index
    %142 = vector.load %arg4[%c16, %c0_86] : memref<32x16xf32, #tpu.memory_space<vmem>>, vector<16x16xf32>
    %c16_87 = arith.constant 16 : index
    %c0_88 = arith.constant 0 : index
    %143 = vector.load %arg5[%c16_87, %c0_88] : memref<32x1xf32, #tpu.memory_space<vmem>>, vector<16x1xf32>
    %cst_89 = arith.constant dense<0.000000e+00> : vector<16x128xf32>
    %144 = tpu.matmul %142, %141, %cst_89 {dimension_numbers = #tpu.dot_dimension_numbers<[1], [0], [0], [1], [0, 0, 1, 1], [], []>} : vector<16x16xf32>, vector<16x128xf32>, vector<16x128xf32> -> vector<16x128xf32>
    %145 = vector.broadcast %143 : vector<16x1xf32> to vector<16x128xf32>
    %146 = arith.addf %144, %145 : vector<16x128xf32>
    %cst_90 = arith.constant 0.000000e+00 : f32
    %147 = vector.broadcast %cst_90 : f32 to vector<16x128xf32>
    %148 = arith.maximumf %146, %147 : vector<16x128xf32>
    %149 = vector.extract_strided_slice %148 {offsets = [0, 0], sizes = [4, 128], strides = [1, 1]} : vector<16x128xf32> to vector<4x128xf32>
    %c9_i32_91 = arith.constant 9 : i32
    %150 = tpu.dynamic_rotate %149 by %c9_i32_91 dim 1 : vector<4x128xf32>, i32 -> vector<4x128xf32>
    %c0_92 = arith.constant 0 : index
    %c0_93 = arith.constant 0 : index
    %151 = vector.load %arg1[%c0_92, %c0_93] : memref<9x128xf32, #tpu.memory_space<vmem>>, vector<1x128xf32>
    %152 = vector.broadcast %151 : vector<1x128xf32> to vector<4x128xf32>
    %153 = arith.mulf %150, %152 : vector<4x128xf32>
    %c8_i32_94 = arith.constant 8 : i32
    %154 = tpu.dynamic_rotate %149 by %c8_i32_94 dim 1 : vector<4x128xf32>, i32 -> vector<4x128xf32>
    %c1_95 = arith.constant 1 : index
    %c0_96 = arith.constant 0 : index
    %155 = vector.load %arg1[%c1_95, %c0_96] : memref<9x128xf32, #tpu.memory_space<vmem>>, vector<1x128xf32>
    %156 = vector.broadcast %155 : vector<1x128xf32> to vector<4x128xf32>
    %157 = arith.mulf %154, %156 : vector<4x128xf32>
    %c7_i32_97 = arith.constant 7 : i32
    %158 = tpu.dynamic_rotate %149 by %c7_i32_97 dim 1 : vector<4x128xf32>, i32 -> vector<4x128xf32>
    %c2_98 = arith.constant 2 : index
    %c0_99 = arith.constant 0 : index
    %159 = vector.load %arg1[%c2_98, %c0_99] : memref<9x128xf32, #tpu.memory_space<vmem>>, vector<1x128xf32>
    %160 = vector.broadcast %159 : vector<1x128xf32> to vector<4x128xf32>
    %161 = arith.mulf %158, %160 : vector<4x128xf32>
    %c1_i32_100 = arith.constant 1 : i32
    %162 = tpu.dynamic_rotate %149 by %c1_i32_100 dim 1 : vector<4x128xf32>, i32 -> vector<4x128xf32>
    %c3_101 = arith.constant 3 : index
    %c0_102 = arith.constant 0 : index
    %163 = vector.load %arg1[%c3_101, %c0_102] : memref<9x128xf32, #tpu.memory_space<vmem>>, vector<1x128xf32>
    %164 = vector.broadcast %163 : vector<1x128xf32> to vector<4x128xf32>
    %165 = arith.mulf %162, %164 : vector<4x128xf32>
    %c127_i32_103 = arith.constant 127 : i32
    %166 = tpu.dynamic_rotate %149 by %c127_i32_103 dim 1 : vector<4x128xf32>, i32 -> vector<4x128xf32>
    %c5_104 = arith.constant 5 : index
    %c0_105 = arith.constant 0 : index
    %167 = vector.load %arg1[%c5_104, %c0_105] : memref<9x128xf32, #tpu.memory_space<vmem>>, vector<1x128xf32>
    %168 = vector.broadcast %167 : vector<1x128xf32> to vector<4x128xf32>
    %169 = arith.mulf %166, %168 : vector<4x128xf32>
    %c121_i32_106 = arith.constant 121 : i32
    %170 = tpu.dynamic_rotate %149 by %c121_i32_106 dim 1 : vector<4x128xf32>, i32 -> vector<4x128xf32>
    %c6_107 = arith.constant 6 : index
    %c0_108 = arith.constant 0 : index
    %171 = vector.load %arg1[%c6_107, %c0_108] : memref<9x128xf32, #tpu.memory_space<vmem>>, vector<1x128xf32>
    %172 = vector.broadcast %171 : vector<1x128xf32> to vector<4x128xf32>
    %173 = arith.mulf %170, %172 : vector<4x128xf32>
    %c120_i32_109 = arith.constant 120 : i32
    %174 = tpu.dynamic_rotate %149 by %c120_i32_109 dim 1 : vector<4x128xf32>, i32 -> vector<4x128xf32>
    %c7_110 = arith.constant 7 : index
    %c0_111 = arith.constant 0 : index
    %175 = vector.load %arg1[%c7_110, %c0_111] : memref<9x128xf32, #tpu.memory_space<vmem>>, vector<1x128xf32>
    %176 = vector.broadcast %175 : vector<1x128xf32> to vector<4x128xf32>
    %177 = arith.mulf %174, %176 : vector<4x128xf32>
    %c119_i32_112 = arith.constant 119 : i32
    %178 = tpu.dynamic_rotate %149 by %c119_i32_112 dim 1 : vector<4x128xf32>, i32 -> vector<4x128xf32>
    %c8_113 = arith.constant 8 : index
    %c0_114 = arith.constant 0 : index
    %179 = vector.load %arg1[%c8_113, %c0_114] : memref<9x128xf32, #tpu.memory_space<vmem>>, vector<1x128xf32>
    %180 = vector.broadcast %179 : vector<1x128xf32> to vector<4x128xf32>
    %181 = arith.mulf %178, %180 : vector<4x128xf32>
    %182 = tpu.concatenate %153, %157, %161, %165, %149, %169, %173, %177, %181 in 0 : vector<4x128xf32>, vector<4x128xf32>, vector<4x128xf32>, vector<4x128xf32>, vector<4x128xf32>, vector<4x128xf32>, vector<4x128xf32>, vector<4x128xf32>, vector<4x128xf32> -> vector<36x128xf32>
    %c12 = arith.constant 12 : index
    %c0_115 = arith.constant 0 : index
    %183 = vector.load %arg6[%c12, %c0_115] : memref<24x36xf32, #tpu.memory_space<vmem>>, vector<4x36xf32>
    %cst_116 = arith.constant dense<0.000000e+00> : vector<4x128xf32>
    %184 = tpu.matmul %183, %182, %cst_116 {dimension_numbers = #tpu.dot_dimension_numbers<[1], [0], [0], [1], [0, 0, 1, 1], [], []>} : vector<4x36xf32>, vector<36x128xf32>, vector<4x128xf32> -> vector<4x128xf32>
    %c12_117 = arith.constant 12 : index
    %c0_118 = arith.constant 0 : index
    %185 = vector.load %arg7[%c12_117, %c0_118] : memref<24x1xf32, #tpu.memory_space<vmem>>, vector<4x1xf32>
    %186 = vector.broadcast %185 : vector<4x1xf32> to vector<4x128xf32>
    %187 = arith.addf %184, %186 : vector<4x128xf32>
    %cst_119 = arith.constant 0.000000e+00 : f32
    %188 = vector.broadcast %cst_119 : f32 to vector<4x128xf32>
    %189 = arith.maximumf %187, %188 : vector<4x128xf32>
    %190 = vector.extract_strided_slice %148 {offsets = [4, 0], sizes = [4, 128], strides = [1, 1]} : vector<16x128xf32> to vector<4x128xf32>
    %191 = arith.addf %189, %190 : vector<4x128xf32>
    %c9_i32_120 = arith.constant 9 : i32
    %192 = tpu.dynamic_rotate %191 by %c9_i32_120 dim 1 : vector<4x128xf32>, i32 -> vector<4x128xf32>
    %c0_121 = arith.constant 0 : index
    %c0_122 = arith.constant 0 : index
    %193 = vector.load %arg1[%c0_121, %c0_122] : memref<9x128xf32, #tpu.memory_space<vmem>>, vector<1x128xf32>
    %194 = vector.broadcast %193 : vector<1x128xf32> to vector<4x128xf32>
    %195 = arith.mulf %192, %194 : vector<4x128xf32>
    %c8_i32_123 = arith.constant 8 : i32
    %196 = tpu.dynamic_rotate %191 by %c8_i32_123 dim 1 : vector<4x128xf32>, i32 -> vector<4x128xf32>
    %c1_124 = arith.constant 1 : index
    %c0_125 = arith.constant 0 : index
    %197 = vector.load %arg1[%c1_124, %c0_125] : memref<9x128xf32, #tpu.memory_space<vmem>>, vector<1x128xf32>
    %198 = vector.broadcast %197 : vector<1x128xf32> to vector<4x128xf32>
    %199 = arith.mulf %196, %198 : vector<4x128xf32>
    %c7_i32_126 = arith.constant 7 : i32
    %200 = tpu.dynamic_rotate %191 by %c7_i32_126 dim 1 : vector<4x128xf32>, i32 -> vector<4x128xf32>
    %c2_127 = arith.constant 2 : index
    %c0_128 = arith.constant 0 : index
    %201 = vector.load %arg1[%c2_127, %c0_128] : memref<9x128xf32, #tpu.memory_space<vmem>>, vector<1x128xf32>
    %202 = vector.broadcast %201 : vector<1x128xf32> to vector<4x128xf32>
    %203 = arith.mulf %200, %202 : vector<4x128xf32>
    %c1_i32_129 = arith.constant 1 : i32
    %204 = tpu.dynamic_rotate %191 by %c1_i32_129 dim 1 : vector<4x128xf32>, i32 -> vector<4x128xf32>
    %c3_130 = arith.constant 3 : index
    %c0_131 = arith.constant 0 : index
    %205 = vector.load %arg1[%c3_130, %c0_131] : memref<9x128xf32, #tpu.memory_space<vmem>>, vector<1x128xf32>
    %206 = vector.broadcast %205 : vector<1x128xf32> to vector<4x128xf32>
    %207 = arith.mulf %204, %206 : vector<4x128xf32>
    %c127_i32_132 = arith.constant 127 : i32
    %208 = tpu.dynamic_rotate %191 by %c127_i32_132 dim 1 : vector<4x128xf32>, i32 -> vector<4x128xf32>
    %c5_133 = arith.constant 5 : index
    %c0_134 = arith.constant 0 : index
    %209 = vector.load %arg1[%c5_133, %c0_134] : memref<9x128xf32, #tpu.memory_space<vmem>>, vector<1x128xf32>
    %210 = vector.broadcast %209 : vector<1x128xf32> to vector<4x128xf32>
    %211 = arith.mulf %208, %210 : vector<4x128xf32>
    %c121_i32_135 = arith.constant 121 : i32
    %212 = tpu.dynamic_rotate %191 by %c121_i32_135 dim 1 : vector<4x128xf32>, i32 -> vector<4x128xf32>
    %c6_136 = arith.constant 6 : index
    %c0_137 = arith.constant 0 : index
    %213 = vector.load %arg1[%c6_136, %c0_137] : memref<9x128xf32, #tpu.memory_space<vmem>>, vector<1x128xf32>
    %214 = vector.broadcast %213 : vector<1x128xf32> to vector<4x128xf32>
    %215 = arith.mulf %212, %214 : vector<4x128xf32>
    %c120_i32_138 = arith.constant 120 : i32
    %216 = tpu.dynamic_rotate %191 by %c120_i32_138 dim 1 : vector<4x128xf32>, i32 -> vector<4x128xf32>
    %c7_139 = arith.constant 7 : index
    %c0_140 = arith.constant 0 : index
    %217 = vector.load %arg1[%c7_139, %c0_140] : memref<9x128xf32, #tpu.memory_space<vmem>>, vector<1x128xf32>
    %218 = vector.broadcast %217 : vector<1x128xf32> to vector<4x128xf32>
    %219 = arith.mulf %216, %218 : vector<4x128xf32>
    %c119_i32_141 = arith.constant 119 : i32
    %220 = tpu.dynamic_rotate %191 by %c119_i32_141 dim 1 : vector<4x128xf32>, i32 -> vector<4x128xf32>
    %c8_142 = arith.constant 8 : index
    %c0_143 = arith.constant 0 : index
    %221 = vector.load %arg1[%c8_142, %c0_143] : memref<9x128xf32, #tpu.memory_space<vmem>>, vector<1x128xf32>
    %222 = vector.broadcast %221 : vector<1x128xf32> to vector<4x128xf32>
    %223 = arith.mulf %220, %222 : vector<4x128xf32>
    %224 = tpu.concatenate %195, %199, %203, %207, %191, %211, %215, %219, %223 in 0 : vector<4x128xf32>, vector<4x128xf32>, vector<4x128xf32>, vector<4x128xf32>, vector<4x128xf32>, vector<4x128xf32>, vector<4x128xf32>, vector<4x128xf32>, vector<4x128xf32> -> vector<36x128xf32>
    %c16_144 = arith.constant 16 : index
    %c0_145 = arith.constant 0 : index
    %225 = vector.load %arg6[%c16_144, %c0_145] : memref<24x36xf32, #tpu.memory_space<vmem>>, vector<4x36xf32>
    %cst_146 = arith.constant dense<0.000000e+00> : vector<4x128xf32>
    %226 = tpu.matmul %225, %224, %cst_146 {dimension_numbers = #tpu.dot_dimension_numbers<[1], [0], [0], [1], [0, 0, 1, 1], [], []>} : vector<4x36xf32>, vector<36x128xf32>, vector<4x128xf32> -> vector<4x128xf32>
    %c16_147 = arith.constant 16 : index
    %c0_148 = arith.constant 0 : index
    %227 = vector.load %arg7[%c16_147, %c0_148] : memref<24x1xf32, #tpu.memory_space<vmem>>, vector<4x1xf32>
    %228 = vector.broadcast %227 : vector<4x1xf32> to vector<4x128xf32>
    %229 = arith.addf %226, %228 : vector<4x128xf32>
    %cst_149 = arith.constant 0.000000e+00 : f32
    %230 = vector.broadcast %cst_149 : f32 to vector<4x128xf32>
    %231 = arith.maximumf %229, %230 : vector<4x128xf32>
    %232 = vector.extract_strided_slice %148 {offsets = [8, 0], sizes = [4, 128], strides = [1, 1]} : vector<16x128xf32> to vector<4x128xf32>
    %233 = arith.addf %231, %232 : vector<4x128xf32>
    %c9_i32_150 = arith.constant 9 : i32
    %234 = tpu.dynamic_rotate %233 by %c9_i32_150 dim 1 : vector<4x128xf32>, i32 -> vector<4x128xf32>
    %c0_151 = arith.constant 0 : index
    %c0_152 = arith.constant 0 : index
    %235 = vector.load %arg1[%c0_151, %c0_152] : memref<9x128xf32, #tpu.memory_space<vmem>>, vector<1x128xf32>
    %236 = vector.broadcast %235 : vector<1x128xf32> to vector<4x128xf32>
    %237 = arith.mulf %234, %236 : vector<4x128xf32>
    %c8_i32_153 = arith.constant 8 : i32
    %238 = tpu.dynamic_rotate %233 by %c8_i32_153 dim 1 : vector<4x128xf32>, i32 -> vector<4x128xf32>
    %c1_154 = arith.constant 1 : index
    %c0_155 = arith.constant 0 : index
    %239 = vector.load %arg1[%c1_154, %c0_155] : memref<9x128xf32, #tpu.memory_space<vmem>>, vector<1x128xf32>
    %240 = vector.broadcast %239 : vector<1x128xf32> to vector<4x128xf32>
    %241 = arith.mulf %238, %240 : vector<4x128xf32>
    %c7_i32_156 = arith.constant 7 : i32
    %242 = tpu.dynamic_rotate %233 by %c7_i32_156 dim 1 : vector<4x128xf32>, i32 -> vector<4x128xf32>
    %c2_157 = arith.constant 2 : index
    %c0_158 = arith.constant 0 : index
    %243 = vector.load %arg1[%c2_157, %c0_158] : memref<9x128xf32, #tpu.memory_space<vmem>>, vector<1x128xf32>
    %244 = vector.broadcast %243 : vector<1x128xf32> to vector<4x128xf32>
    %245 = arith.mulf %242, %244 : vector<4x128xf32>
    %c1_i32_159 = arith.constant 1 : i32
    %246 = tpu.dynamic_rotate %233 by %c1_i32_159 dim 1 : vector<4x128xf32>, i32 -> vector<4x128xf32>
    %c3_160 = arith.constant 3 : index
    %c0_161 = arith.constant 0 : index
    %247 = vector.load %arg1[%c3_160, %c0_161] : memref<9x128xf32, #tpu.memory_space<vmem>>, vector<1x128xf32>
    %248 = vector.broadcast %247 : vector<1x128xf32> to vector<4x128xf32>
    %249 = arith.mulf %246, %248 : vector<4x128xf32>
    %c127_i32_162 = arith.constant 127 : i32
    %250 = tpu.dynamic_rotate %233 by %c127_i32_162 dim 1 : vector<4x128xf32>, i32 -> vector<4x128xf32>
    %c5_163 = arith.constant 5 : index
    %c0_164 = arith.constant 0 : index
    %251 = vector.load %arg1[%c5_163, %c0_164] : memref<9x128xf32, #tpu.memory_space<vmem>>, vector<1x128xf32>
    %252 = vector.broadcast %251 : vector<1x128xf32> to vector<4x128xf32>
    %253 = arith.mulf %250, %252 : vector<4x128xf32>
    %c121_i32_165 = arith.constant 121 : i32
    %254 = tpu.dynamic_rotate %233 by %c121_i32_165 dim 1 : vector<4x128xf32>, i32 -> vector<4x128xf32>
    %c6_166 = arith.constant 6 : index
    %c0_167 = arith.constant 0 : index
    %255 = vector.load %arg1[%c6_166, %c0_167] : memref<9x128xf32, #tpu.memory_space<vmem>>, vector<1x128xf32>
    %256 = vector.broadcast %255 : vector<1x128xf32> to vector<4x128xf32>
    %257 = arith.mulf %254, %256 : vector<4x128xf32>
    %c120_i32_168 = arith.constant 120 : i32
    %258 = tpu.dynamic_rotate %233 by %c120_i32_168 dim 1 : vector<4x128xf32>, i32 -> vector<4x128xf32>
    %c7_169 = arith.constant 7 : index
    %c0_170 = arith.constant 0 : index
    %259 = vector.load %arg1[%c7_169, %c0_170] : memref<9x128xf32, #tpu.memory_space<vmem>>, vector<1x128xf32>
    %260 = vector.broadcast %259 : vector<1x128xf32> to vector<4x128xf32>
    %261 = arith.mulf %258, %260 : vector<4x128xf32>
    %c119_i32_171 = arith.constant 119 : i32
    %262 = tpu.dynamic_rotate %233 by %c119_i32_171 dim 1 : vector<4x128xf32>, i32 -> vector<4x128xf32>
    %c8_172 = arith.constant 8 : index
    %c0_173 = arith.constant 0 : index
    %263 = vector.load %arg1[%c8_172, %c0_173] : memref<9x128xf32, #tpu.memory_space<vmem>>, vector<1x128xf32>
    %264 = vector.broadcast %263 : vector<1x128xf32> to vector<4x128xf32>
    %265 = arith.mulf %262, %264 : vector<4x128xf32>
    %266 = tpu.concatenate %237, %241, %245, %249, %233, %253, %257, %261, %265 in 0 : vector<4x128xf32>, vector<4x128xf32>, vector<4x128xf32>, vector<4x128xf32>, vector<4x128xf32>, vector<4x128xf32>, vector<4x128xf32>, vector<4x128xf32>, vector<4x128xf32> -> vector<36x128xf32>
    %c20 = arith.constant 20 : index
    %c0_174 = arith.constant 0 : index
    %267 = vector.load %arg6[%c20, %c0_174] : memref<24x36xf32, #tpu.memory_space<vmem>>, vector<4x36xf32>
    %cst_175 = arith.constant dense<0.000000e+00> : vector<4x128xf32>
    %268 = tpu.matmul %267, %266, %cst_175 {dimension_numbers = #tpu.dot_dimension_numbers<[1], [0], [0], [1], [0, 0, 1, 1], [], []>} : vector<4x36xf32>, vector<36x128xf32>, vector<4x128xf32> -> vector<4x128xf32>
    %c20_176 = arith.constant 20 : index
    %c0_177 = arith.constant 0 : index
    %269 = vector.load %arg7[%c20_176, %c0_177] : memref<24x1xf32, #tpu.memory_space<vmem>>, vector<4x1xf32>
    %270 = vector.broadcast %269 : vector<4x1xf32> to vector<4x128xf32>
    %271 = arith.addf %268, %270 : vector<4x128xf32>
    %cst_178 = arith.constant 0.000000e+00 : f32
    %272 = vector.broadcast %cst_178 : f32 to vector<4x128xf32>
    %273 = arith.maximumf %271, %272 : vector<4x128xf32>
    %274 = vector.extract_strided_slice %148 {offsets = [12, 0], sizes = [4, 128], strides = [1, 1]} : vector<16x128xf32> to vector<4x128xf32>
    %275 = tpu.concatenate %189, %231, %273, %274 in 0 : vector<4x128xf32>, vector<4x128xf32>, vector<4x128xf32>, vector<4x128xf32> -> vector<16x128xf32>
    %c0_179 = arith.constant 0 : index
    %c0_180 = arith.constant 0 : index
    %276 = vector.load %arg8[%c0_179, %c0_180] : memref<16x128xf32, #tpu.memory_space<vmem>>, vector<16x128xf32>
    tpu.vector_store %arg8[%c0_179, %c0_180], %275 {strides = array<i32>} : memref<16x128xf32, #tpu.memory_space<vmem>>, vector<16x128xf32>,
    return
  }
}

</mosaic_0001>

<llo_original>
// kernel: _lambda_.1
$region0: #{_lambda_.1}
  #allocation0 [shape = 'u32[]', space=smem, size = 0x4, offset = 0x4, fixed_abs, tag = 'smem constant byte address 0x4 - core index']
  #allocation1 [shape = 'u32[144,128]{1,0:T(1,128)}', space=vmem, size = 0x12000, scoped, tag = 'internal scratch']
  %s0 = inlined_call_operand.vmem [shape: f32[16,128], index: 0, kind: input, shape index: {}]
  %s1 = inlined_call_operand.vmem [shape: f32[9,128], index: 1, kind: input, shape index: {}]
  %s2 = inlined_call_operand.vmem [shape: f32[16,16], index: 2, kind: input, shape index: {}]
  %s3 = inlined_call_operand.vmem [shape: f32[16,1], index: 3, kind: input, shape index: {}]
  %s4 = inlined_call_operand.vmem [shape: f32[32,16], index: 4, kind: input, shape index: {}]
  %s5 = inlined_call_operand.vmem [shape: f32[32,1], index: 5, kind: input, shape index: {}]
  %s6 = inlined_call_operand.vmem [shape: f32[24,36], index: 6, kind: input, shape index: {}]
  %s7 = inlined_call_operand.vmem [shape: f32[24,1], index: 7, kind: input, shape index: {}]
  %s8 = inlined_call_operand.vmem [shape: f32[16,128], index: 8, kind: output, shape index: {}]
  %s9 = sld [smem:[#allocation0]]
  $region42: #{_lambda_.1} parent=0
    _
  %s11 = ssub.s32 1, %s9
  %s12 = scalar_select 0, %s11, %s9
  // Predicated region
  $region2: #{_lambda_.1} parent=0 // pred_check
    _
  $region3: #{_lambda_.1} parent=0 // pred_check_branch
    %14 = sbr.rel (0) target = $region5
  $region4: #{_lambda_.1} parent=0 // pred_region
    _
  $region5: #{_lambda_.1} parent=0 // pred_fallthru
    _
  // Predicated region
  $region6: #{_lambda_.1} parent=0 // pred_check
    _
  $region7: #{_lambda_.1} parent=0 // pred_check_branch
    %16 = sbr.rel (0) target = $region9
  $region8: #{_lambda_.1} parent=0 // pred_region
    _
  $region9: #{_lambda_.1} parent=0 // pred_fallthru
    _
  // Predicated region
  $region10: #{_lambda_.1} parent=0 // pred_check
    _
  $region11: #{_lambda_.1} parent=0 // pred_check_branch
    %18 = sbr.rel (0) target = $region13
  $region12: #{_lambda_.1} parent=0 // pred_region
    _
  $region13: #{_lambda_.1} parent=0 // pred_fallthru
    _
  // Predicated region
  $region14: #{_lambda_.1} parent=0 // pred_check
    _
  $region15: #{_lambda_.1} parent=0 // pred_check_branch
    %20 = sbr.rel (0) target = $region17
  $region16: #{_lambda_.1} parent=0 // pred_region
    _
  $region17: #{_lambda_.1} parent=0 // pred_fallthru
    _
  // Predicated region
  $region18: #{_lambda_.1} parent=0 // pred_check
    _
  $region19: #{_lambda_.1} parent=0 // pred_check_branch
    %22 = sbr.rel (0) target = $region21
  $region20: #{_lambda_.1} parent=0 // pred_region
    _
  $region21: #{_lambda_.1} parent=0 // pred_fallthru
    _
  // Predicated region
  $region22: #{_lambda_.1} parent=0 // pred_check
    _
  $region23: #{_lambda_.1} parent=0 // pred_check_branch
    %24 = sbr.rel (0) target = $region25
  $region24: #{_lambda_.1} parent=0 // pred_region
    _
  $region25: #{_lambda_.1} parent=0 // pred_fallthru
    _
  // Predicated region
  $region26: #{_lambda_.1} parent=0 // pred_check
    _
  $region27: #{_lambda_.1} parent=0 // pred_check_branch
    %26 = sbr.rel (0) target = $region29
  $region28: #{_lambda_.1} parent=0 // pred_region
    _
  $region29: #{_lambda_.1} parent=0 // pred_fallthru
    _
  // Predicated region
  $region30: #{_lambda_.1} parent=0 // pred_check
    _
  $region31: #{_lambda_.1} parent=0 // pred_check_branch
    %28 = sbr.rel (0) target = $region33
  $region32: #{_lambda_.1} parent=0 // pred_region
    _
  $region33: #{_lambda_.1} parent=0 // pred_fallthru
    _
  %v29 = vld [vmem:[%s2] sm:$0xff]
  %v30 = vld [vmem:[%s2 + $0x8] sm:$0xff]
  %v31 = vld [vmem:[%s0] sm:$0xff]
  %v32 = vld [vmem:[%s0 + $0x8] sm:$0xff]
  %v33 = vld [vmem:[%s3] sm:$0xff]
  %v34 = vld [vmem:[%s3 + $0x8] sm:$0xff]
  %36 = vset.pattern.permute.xlu0 0
  %37 = vperm.xlu0 %36, %v33
  %v38 = vpop.permute.xlu0 %37
  %41 = vset.pattern.permute.xlu0 0
  %42 = vperm.xlu0 %41, %v34
  %v43 = vpop.permute.xlu0 %42
  %vm45 = vcmask 130048
  %v47 = vsel %vm45, %v29, 0
  %v50 = vsel %vm45, %v30, 0
  %52 = vmatprep.subr.mxu0 0.0
  %53 = vmatpush1.msra.mxu0 %v31
  %54 = vmatprep.subr.mxu0 0.0
  %55 = vmatpush1.msra.mxu0 %v32
  %56 = vmatprep.subr.mxu0 0.0
  %57 = vmatpush1.msra.mxu0 0.0
  %58 = vmatprep.subr.mxu0 0.0
  %59 = vmatpush1.msra.mxu0 0.0
  %60 = vmatprep.subr.mxu0 0.0
  %61 = vmatpush1.msra.mxu0 0.0
  %62 = vmatprep.subr.mxu0 0.0
  %63 = vmatpush1.msra.mxu0 0.0
  %64 = vmatprep.subr.mxu0 0.0
  %65 = vmatpush1.msra.mxu0 0.0
  %66 = vmatprep.subr.mxu0 0.0
  %67 = vmatpush1.msra.mxu0 0.0
  %68 = vmatprep.subr.mxu0 0.0
  %69 = vmatpush1.msra.mxu0 0.0
  %70 = vmatprep.subr.mxu0 0.0
  %71 = vmatpush1.msra.mxu0 0.0
  %72 = vmatprep.subr.mxu0 0.0
  %73 = vmatpush1.msra.mxu0 0.0
  %74 = vmatprep.subr.mxu0 0.0
  %75 = vmatpush1.msra.mxu0 0.0
  %76 = vmatprep.subr.mxu0 0.0
  %77 = vmatpush1.msra.mxu0 0.0
  %78 = vmatprep.subr.mxu0 0.0
  %79 = vmatpush1.msra.mxu0 0.0
  %80 = vmatprep.subr.mxu0 0.0
  %81 = vmatpush1.msra.mxu0 0.0
  %82 = vmatprep.subr.mxu0 0.0
  %83 = vmatpush1.msra.mxu0 0.0
  %84 = vmatprep.subr.mxu0 0.0
  %85 = vmatpush1.msra.mxu0 0.0
  %86 = vmatprep.subr.mxu0 0.0
  %87 = vmatpush1.msra.mxu0 0.0
  %88 = vmatprep.subr.mxu0 0.0
  %89 = vmatpush1.msra.mxu0 0.0
  %90 = vmatprep.subr.mxu0 0.0
  %91 = vmatpush1.msra.mxu0 0.0
  %92 = vmatprep.subr.mxu0 0.0
  %93 = vmatpush1.msra.mxu0 0.0
  %94 = vmatprep.subr.mxu0 0.0
  %95 = vmatpush1.msra.mxu0 0.0
  %96 = vmatprep.subr.mxu0 0.0
  %97 = vmatpush1.msra.mxu0 0.0
  %98 = vmatprep.subr.mxu0 0.0
  %99 = vmatpush1.msra.mxu0 0.0
  %100 = vmatprep.subr.mxu0 0.0
  %101 = vmatpush1.msra.mxu0 0.0
  %102 = vmatprep.subr.mxu0 0.0
  %103 = vmatpush1.msra.mxu0 0.0
  %104 = vmatprep.subr.mxu0 0.0
  %105 = vmatpush1.msra.mxu0 0.0
  %106 = vmatprep.subr.mxu0 0.0
  %107 = vmatpush1.msra.mxu0 0.0
  %108 = vmatprep.subr.mxu0 0.0
  %109 = vmatpush1.msra.mxu0 0.0
  %110 = vmatprep.subr.mxu0 0.0
  %111 = vmatpush1.msra.mxu0 0.0
  %112 = vmatprep.subr.mxu0 0.0
  %113 = vmatpush1.msra.mxu0 0.0
  %114 = vmatprep.subr.mxu0 0.0
  %115 = vmatpush1.msra.mxu0 0.0
  %116 = vmatprep.mubr.f32.mxu0 0.0
  %117 = vmatmul.mubr.f32.gmra.mrb[0].mxu0 %v47
  %v118 = vpop.f32.mrb[0].mxu0
  %v119 = vadd.f32 %v38, %v118
  %v120 = vpop.f32.mrb[0].mxu0
  %121 = vmatprep.mubr.f32.mxu0 0.0
  %122 = vmatmul.mubr.f32.gmra.mrb[0].mxu0 %v50
  %v123 = vpop.f32.mrb[0].mxu0
  %v124 = vadd.f32 %v43, %v123
  %v125 = vpop.f32.mrb[0].mxu0
  %126 = vdwg.mxu0
  %v127 = vmax.f32 %v119, 0.0
  %v128 = vmax.f32 %v124, 0.0
  %v129 = vld [vmem:[%s4] sm:$0xff]
  %v130 = vld [vmem:[%s4 + $0x8] sm:$0xff]
  %v131 = vld [vmem:[%s5] sm:$0xff]
  %v132 = vld [vmem:[%s5 + $0x8] sm:$0xff]
  %134 = vset.pattern.permute.xlu0 0
  %135 = vperm.xlu0 %134, %v131
  %v136 = vpop.permute.xlu0 %135
  %139 = vset.pattern.permute.xlu0 0
  %140 = vperm.xlu0 %139, %v132
  %v141 = vpop.permute.xlu0 %140
  %v144 = vsel %vm45, %v129, 0
  %v147 = vsel %vm45, %v130, 0
  %149 = vmatprep.subr.mxu0 0.0
  %150 = vmatpush1.msra.mxu0 %v127
  %151 = vmatprep.subr.mxu0 0.0
  %152 = vmatpush1.msra.mxu0 %v128
  %153 = vmatprep.subr.mxu0 0.0
  %154 = vmatpush1.msra.mxu0 0.0
  %155 = vmatprep.subr.mxu0 0.0
  %156 = vmatpush1.msra.mxu0 0.0
  %157 = vmatprep.subr.mxu0 0.0
  %158 = vmatpush1.msra.mxu0 0.0
  %159 = vmatprep.subr.mxu0 0.0
  %160 = vmatpush1.msra.mxu0 0.0
  %161 = vmatprep.subr.mxu0 0.0
  %162 = vmatpush1.msra.mxu0 0.0
  %163 = vmatprep.subr.mxu0 0.0
  %164 = vmatpush1.msra.mxu0 0.0
  %165 = vmatprep.subr.mxu0 0.0
  %166 = vmatpush1.msra.mxu0 0.0
  %167 = vmatprep.subr.mxu0 0.0
  %168 = vmatpush1.msra.mxu0 0.0
  %169 = vmatprep.subr.mxu0 0.0
  %170 = vmatpush1.msra.mxu0 0.0
  %171 = vmatprep.subr.mxu0 0.0
  %172 = vmatpush1.msra.mxu0 0.0
  %173 = vmatprep.subr.mxu0 0.0
  %174 = vmatpush1.msra.mxu0 0.0
  %175 = vmatprep.subr.mxu0 0.0
  %176 = vmatpush1.msra.mxu0 0.0
  %177 = vmatprep.subr.mxu0 0.0
  %178 = vmatpush1.msra.mxu0 0.0
  %179 = vmatprep.subr.mxu0 0.0
  %180 = vmatpush1.msra.mxu0 0.0
  %181 = vmatprep.subr.mxu0 0.0
  %182 = vmatpush1.msra.mxu0 0.0
  %183 = vmatprep.subr.mxu0 0.0
  %184 = vmatpush1.msra.mxu0 0.0
  %185 = vmatprep.subr.mxu0 0.0
  %186 = vmatpush1.msra.mxu0 0.0
  %187 = vmatprep.subr.mxu0 0.0
  %188 = vmatpush1.msra.mxu0 0.0
  %189 = vmatprep.subr.mxu0 0.0
  %190 = vmatpush1.msra.mxu0 0.0
  %191 = vmatprep.subr.mxu0 0.0
  %192 = vmatpush1.msra.mxu0 0.0
  %193 = vmatprep.subr.mxu0 0.0
  %194 = vmatpush1.msra.mxu0 0.0
  %195 = vmatprep.subr.mxu0 0.0
  %196 = vmatpush1.msra.mxu0 0.0
  %197 = vmatprep.subr.mxu0 0.0
  %198 = vmatpush1.msra.mxu0 0.0
  %199 = vmatprep.subr.mxu0 0.0
  %200 = vmatpush1.msra.mxu0 0.0
  %201 = vmatprep.subr.mxu0 0.0
  %202 = vmatpush1.msra.mxu0 0.0
  %203 = vmatprep.subr.mxu0 0.0
  %204 = vmatpush1.msra.mxu0 0.0
  %205 = vmatprep.subr.mxu0 0.0
  %206 = vmatpush1.msra.mxu0 0.0
  %207 = vmatprep.subr.mxu0 0.0
  %208 = vmatpush1.msra.mxu0 0.0
  %209 = vmatprep.subr.mxu0 0.0
  %210 = vmatpush1.msra.mxu0 0.0
  %211 = vmatprep.subr.mxu0 0.0
  %212 = vmatpush1.msra.mxu0 0.0
  %213 = vmatprep.mubr.f32.mxu0 0.0
  %214 = vmatmul.mubr.f32.gmra.mrb[0].mxu0 %v144
  %v215 = vpop.f32.mrb[0].mxu0
  %v216 = vadd.f32 %v136, %v215
  %v217 = vpop.f32.mrb[0].mxu0
  %218 = vmatprep.mubr.f32.mxu0 0.0
  %219 = vmatmul.mubr.f32.gmra.mrb[0].mxu0 %v147
  %v220 = vpop.f32.mrb[0].mxu0
  %v221 = vadd.f32 %v141, %v220
  %v222 = vpop.f32.mrb[0].mxu0
  %223 = vdwg.mxu0
  %v224 = vmax.f32 %v216, 0.0
  %v225 = vmax.f32 %v221, 0.0
  %226 = vrot.lane.b32.xlu0 %v224, 9
  %v227 = vpop.permute.xlu0 %226
  %v228 = vld [vmem:[%s1] sm:$0x1]
  %v229 = vlaneseq
  %v230 = vshrl.u32 %v229, 7
  %v231 = vsub.s32 0, %v230
  %v232 = vrot.slane %v228, %v231
  %v233 = vmul.f32 %v227, %v232
  %234 = vrot.lane.b32.xlu0 %v224, 8
  %v235 = vpop.permute.xlu0 %234
  %v236 = vld [vmem:[%s1 + $0x1] sm:$0x1]
  %v237 = vlaneseq
  %v238 = vshrl.u32 %v237, 7
  %v239 = vsub.s32 0, %v238
  %v240 = vrot.slane %v236, %v239
  %v241 = vmul.f32 %v235, %v240
  %242 = vrot.lane.b32.xlu0 %v224, 7
  %v243 = vpop.permute.xlu0 %242
  %v244 = vld [vmem:[%s1 + $0x2] sm:$0x1]
  %v245 = vlaneseq
  %v246 = vshrl.u32 %v245, 7
  %v247 = vsub.s32 0, %v246
  %v248 = vrot.slane %v244, %v247
  %v249 = vmul.f32 %v243, %v248
  %250 = vrot.lane.b32.xlu0 %v224, 1
  %v251 = vpop.permute.xlu0 %250
  %v252 = vld [vmem:[%s1 + $0x3] sm:$0x1]
  %v253 = vlaneseq
  %v254 = vshrl.u32 %v253, 7
  %v255 = vsub.s32 0, %v254
  %v256 = vrot.slane %v252, %v255
  %v257 = vmul.f32 %v251, %v256
  %258 = vrot.lane.b32.xlu0 %v224, 127
  %v259 = vpop.permute.xlu0 %258
  %v260 = vld [vmem:[%s1 + $0x5] sm:$0x1]
  %v261 = vlaneseq
  %v262 = vshrl.u32 %v261, 7
  %v263 = vsub.s32 0, %v262
  %v264 = vrot.slane %v260, %v263
  %v265 = vmul.f32 %v259, %v264
  %266 = vrot.lane.b32.xlu0 %v224, 121
  %v267 = vpop.permute.xlu0 %266
  %v268 = vld [vmem:[%s1 + $0x6] sm:$0x1]
  %v269 = vlaneseq
  %v270 = vshrl.u32 %v269, 7
  %v271 = vsub.s32 0, %v270
  %v272 = vrot.slane %v268, %v271
  %v273 = vmul.f32 %v267, %v272
  %274 = vrot.lane.b32.xlu0 %v224, 120
  %v275 = vpop.permute.xlu0 %274
  %v276 = vld [vmem:[%s1 + $0x7] sm:$0x1]
  %v277 = vlaneseq
  %v278 = vshrl.u32 %v277, 7
  %v279 = vsub.s32 0, %v278
  %v280 = vrot.slane %v276, %v279
  %v281 = vmul.f32 %v275, %v280
  %282 = vrot.lane.b32.xlu0 %v224, 119
  %v283 = vpop.permute.xlu0 %282
  %v284 = vld [vmem:[%s1 + $0x8] sm:$0x1]
  %v285 = vlaneseq
  %v286 = vshrl.u32 %v285, 7
  %v287 = vsub.s32 0, %v286
  %v288 = vrot.slane %v284, %v287
  %v289 = vmul.f32 %v283, %v288
  %v291 = vrot.slane %v241, 4
  %v294 = vrot.slane %v257, 4
  %v297 = vrot.slane %v265, 4
  %v300 = vrot.slane %v281, 4
  %vm302 = vcmask 1043456
  %v303 = vsel %vm302, %v233, %v291
  %v304 = vsel %vm302, %v249, %v294
  %v305 = vsel %vm302, %v224, %v297
  %v306 = vsel %vm302, %v273, %v300
  %v307 = vld [vmem:[%s6] sm:$0xf]
  %v308 = vld [vmem:[%s7] sm:$0xf]
  %310 = vset.pattern.permute.xlu0 0
  %311 = vperm.xlu0 %310, %v308
  %v312 = vpop.permute.xlu0 %311
  %vm314 = vcmask 293888
  %v316 = vsel %vm314, %v307, 0
  %v319 = vsel %vm302, %v289, 0
  %321 = vmatprep.subr.mxu0 0.0
  %322 = vmatpush1.msra.mxu0 %v303
  %323 = vmatprep.subr.mxu0 0.0
  %324 = vmatpush1.msra.mxu0 %v304
  %325 = vmatprep.subr.mxu0 0.0
  %326 = vmatpush1.msra.mxu0 %v305
  %327 = vmatprep.subr.mxu0 0.0
  %328 = vmatpush1.msra.mxu0 %v306
  %329 = vmatprep.subr.mxu0 0.0
  %330 = vmatpush1.msra.mxu0 %v319
  %331 = vmatprep.subr.mxu0 0.0
  %332 = vmatpush1.msra.mxu0 0.0
  %333 = vmatprep.subr.mxu0 0.0
  %334 = vmatpush1.msra.mxu0 0.0
  %335 = vmatprep.subr.mxu0 0.0
  %336 = vmatpush1.msra.mxu0 0.0
  %337 = vmatprep.subr.mxu0 0.0
  %338 = vmatpush1.msra.mxu0 0.0
  %339 = vmatprep.subr.mxu0 0.0
  %340 = vmatpush1.msra.mxu0 0.0
  %341 = vmatprep.subr.mxu0 0.0
  %342 = vmatpush1.msra.mxu0 0.0
  %343 = vmatprep.subr.mxu0 0.0
  %344 = vmatpush1.msra.mxu0 0.0
  %345 = vmatprep.subr.mxu0 0.0
  %346 = vmatpush1.msra.mxu0 0.0
  %347 = vmatprep.subr.mxu0 0.0
  %348 = vmatpush1.msra.mxu0 0.0
  %349 = vmatprep.subr.mxu0 0.0
  %350 = vmatpush1.msra.mxu0 0.0
  %351 = vmatprep.subr.mxu0 0.0
  %352 = vmatpush1.msra.mxu0 0.0
  %353 = vmatprep.subr.mxu0 0.0
  %354 = vmatpush1.msra.mxu0 0.0
  %355 = vmatprep.subr.mxu0 0.0
  %356 = vmatpush1.msra.mxu0 0.0
  %357 = vmatprep.subr.mxu0 0.0
  %358 = vmatpush1.msra.mxu0 0.0
  %359 = vmatprep.subr.mxu0 0.0
  %360 = vmatpush1.msra.mxu0 0.0
  %361 = vmatprep.subr.mxu0 0.0
  %362 = vmatpush1.msra.mxu0 0.0
  %363 = vmatprep.subr.mxu0 0.0
  %364 = vmatpush1.msra.mxu0 0.0
  %365 = vmatprep.subr.mxu0 0.0
  %366 = vmatpush1.msra.mxu0 0.0
  %367 = vmatprep.subr.mxu0 0.0
  %368 = vmatpush1.msra.mxu0 0.0
  %369 = vmatprep.subr.mxu0 0.0
  %370 = vmatpush1.msra.mxu0 0.0
  %371 = vmatprep.subr.mxu0 0.0
  %372 = vmatpush1.msra.mxu0 0.0
  %373 = vmatprep.subr.mxu0 0.0
  %374 = vmatpush1.msra.mxu0 0.0
  %375 = vmatprep.subr.mxu0 0.0
  %376 = vmatpush1.msra.mxu0 0.0
  %377 = vmatprep.subr.mxu0 0.0
  %378 = vmatpush1.msra.mxu0 0.0
  %379 = vmatprep.subr.mxu0 0.0
  %380 = vmatpush1.msra.mxu0 0.0
  %381 = vmatprep.subr.mxu0 0.0
  %382 = vmatpush1.msra.mxu0 0.0
  %383 = vmatprep.subr.mxu0 0.0
  %384 = vmatpush1.msra.mxu0 0.0
  %385 = vmatprep.mubr.f32.mxu0 0.0
  %386 = vmatmul.mubr.f32.gmra.mrb[0].mxu0 %v316
  %v387 = vpop.f32.mrb[0].mxu0
  %v388 = vadd.f32 %v312, %v387
  %v389 = vpop.f32.mrb[0].mxu0
  %390 = vdwg.mxu0
  %v391 = vmax.f32 %v388, 0.0
  %v393 = vrot.slane %v224, 4
  %v395 = vadd.f32 %v391, %v393
  %396 = vrot.lane.b32.xlu0 %v395, 9
  %v397 = vpop.permute.xlu0 %396
  %v398 = vmul.f32 %v397, %v232
  %399 = vrot.lane.b32.xlu0 %v395, 8
  %v400 = vpop.permute.xlu0 %399
  %v401 = vmul.f32 %v400, %v240
  %402 = vrot.lane.b32.xlu0 %v395, 7
  %v403 = vpop.permute.xlu0 %402
  %v404 = vmul.f32 %v403, %v248
  %405 = vrot.lane.b32.xlu0 %v395, 1
  %v406 = vpop.permute.xlu0 %405
  %v407 = vmul.f32 %v406, %v256
  %408 = vrot.lane.b32.xlu0 %v395, 127
  %v409 = vpop.permute.xlu0 %408
  %v410 = vmul.f32 %v409, %v264
  %411 = vrot.lane.b32.xlu0 %v395, 121
  %v412 = vpop.permute.xlu0 %411
  %v413 = vmul.f32 %v412, %v272
  %414 = vrot.lane.b32.xlu0 %v395, 120
  %v415 = vpop.permute.xlu0 %414
  %v416 = vmul.f32 %v415, %v280
  %417 = vrot.lane.b32.xlu0 %v395, 119
  %v418 = vpop.permute.xlu0 %417
  %v419 = vmul.f32 %v418, %v288
  %v421 = vrot.slane %v401, 4
  %v424 = vrot.slane %v407, 4
  %v427 = vrot.slane %v410, 4
  %v430 = vrot.slane %v416, 4
  %v432 = vsel %vm302, %v398, %v421
  %v433 = vsel %vm302, %v404, %v424
  %v434 = vsel %vm302, %v395, %v427
  %v435 = vsel %vm302, %v413, %v430
  %v436 = vld [vmem:[%s6 + $0x4] sm:$0xf]
  %v437 = vld [vmem:[%s7 + $0x4] sm:$0xf]
  %439 = vset.pattern.permute.xlu0 0
  %440 = vperm.xlu0 %439, %v437
  %v441 = vpop.permute.xlu0 %440
  %v444 = vsel %vm314, %v436, 0
  %v447 = vsel %vm302, %v419, 0
  %449 = vmatprep.subr.mxu0 0.0
  %450 = vmatpush1.msra.mxu0 %v432
  %451 = vmatprep.subr.mxu0 0.0
  %452 = vmatpush1.msra.mxu0 %v433
  %453 = vmatprep.subr.mxu0 0.0
  %454 = vmatpush1.msra.mxu0 %v434
  %455 = vmatprep.subr.mxu0 0.0
  %456 = vmatpush1.msra.mxu0 %v435
  %457 = vmatprep.subr.mxu0 0.0
  %458 = vmatpush1.msra.mxu0 %v447
  %459 = vmatprep.subr.mxu0 0.0
  %460 = vmatpush1.msra.mxu0 0.0
  %461 = vmatprep.subr.mxu0 0.0
  %462 = vmatpush1.msra.mxu0 0.0
  %463 = vmatprep.subr.mxu0 0.0
  %464 = vmatpush1.msra.mxu0 0.0
  %465 = vmatprep.subr.mxu0 0.0
  %466 = vmatpush1.msra.mxu0 0.0
  %467 = vmatprep.subr.mxu0 0.0
  %468 = vmatpush1.msra.mxu0 0.0
  %469 = vmatprep.subr.mxu0 0.0
  %470 = vmatpush1.msra.mxu0 0.0
  %471 = vmatprep.subr.mxu0 0.0
  %472 = vmatpush1.msra.mxu0 0.0
  %473 = vmatprep.subr.mxu0 0.0
  %474 = vmatpush1.msra.mxu0 0.0
  %475 = vmatprep.subr.mxu0 0.0
  %476 = vmatpush1.msra.mxu0 0.0
  %477 = vmatprep.subr.mxu0 0.0
  %478 = vmatpush1.msra.mxu0 0.0
  %479 = vmatprep.subr.mxu0 0.0
  %480 = vmatpush1.msra.mxu0 0.0
  %481 = vmatprep.subr.mxu0 0.0
  %482 = vmatpush1.msra.mxu0 0.0
  %483 = vmatprep.subr.mxu0 0.0
  %484 = vmatpush1.msra.mxu0 0.0
  %485 = vmatprep.subr.mxu0 0.0
  %486 = vmatpush1.msra.mxu0 0.0
  %487 = vmatprep.subr.mxu0 0.0
  %488 = vmatpush1.msra.mxu0 0.0
  %489 = vmatprep.subr.mxu0 0.0
  %490 = vmatpush1.msra.mxu0 0.0
  %491 = vmatprep.subr.mxu0 0.0
  %492 = vmatpush1.msra.mxu0 0.0
  %493 = vmatprep.subr.mxu0 0.0
  %494 = vmatpush1.msra.mxu0 0.0
  %495 = vmatprep.subr.mxu0 0.0
  %496 = vmatpush1.msra.mxu0 0.0
  %497 = vmatprep.subr.mxu0 0.0
  %498 = vmatpush1.msra.mxu0 0.0
  %499 = vmatprep.subr.mxu0 0.0
  %500 = vmatpush1.msra.mxu0 0.0
  %501 = vmatprep.subr.mxu0 0.0
  %502 = vmatpush1.msra.mxu0 0.0
  %503 = vmatprep.subr.mxu0 0.0
  %504 = vmatpush1.msra.mxu0 0.0
  %505 = vmatprep.subr.mxu0 0.0
  %506 = vmatpush1.msra.mxu0 0.0
  %507 = vmatprep.subr.mxu0 0.0
  %508 = vmatpush1.msra.mxu0 0.0
  %509 = vmatprep.subr.mxu0 0.0
  %510 = vmatpush1.msra.mxu0 0.0
  %511 = vmatprep.subr.mxu0 0.0
  %512 = vmatpush1.msra.mxu0 0.0
  %513 = vmatprep.mubr.f32.mxu0 0.0
  %514 = vmatmul.mubr.f32.gmra.mrb[0].mxu0 %v444
  %v515 = vpop.f32.mrb[0].mxu0
  %v516 = vadd.f32 %v441, %v515
  %v517 = vpop.f32.mrb[0].mxu0
  %518 = vdwg.mxu0
  %v519 = vmax.f32 %v516, 0.0
  %v520 = vadd.f32 %v519, %v225
  %521 = vrot.lane.b32.xlu0 %v520, 9
  %v522 = vpop.permute.xlu0 %521
  %v523 = vmul.f32 %v522, %v232
  %524 = vrot.lane.b32.xlu0 %v520, 8
  %v525 = vpop.permute.xlu0 %524
  %v526 = vmul.f32 %v525, %v240
  %527 = vrot.lane.b32.xlu0 %v520, 7
  %v528 = vpop.permute.xlu0 %527
  %v529 = vmul.f32 %v528, %v248
  %530 = vrot.lane.b32.xlu0 %v520, 1
  %v531 = vpop.permute.xlu0 %530
  %v532 = vmul.f32 %v531, %v256
  %533 = vrot.lane.b32.xlu0 %v520, 127
  %v534 = vpop.permute.xlu0 %533
  %v535 = vmul.f32 %v534, %v264
  %536 = vrot.lane.b32.xlu0 %v520, 121
  %v537 = vpop.permute.xlu0 %536
  %v538 = vmul.f32 %v537, %v272
  %539 = vrot.lane.b32.xlu0 %v520, 120
  %v540 = vpop.permute.xlu0 %539
  %v541 = vmul.f32 %v540, %v280
  %542 = vrot.lane.b32.xlu0 %v520, 119
  %v543 = vpop.permute.xlu0 %542
  %v544 = vmul.f32 %v543, %v288
  %v546 = vrot.slane %v526, 4
  %v549 = vrot.slane %v532, 4
  %v552 = vrot.slane %v535, 4
  %v555 = vrot.slane %v541, 4
  %v557 = vsel %vm302, %v523, %v546
  %v558 = vsel %vm302, %v529, %v549
  %v559 = vsel %vm302, %v520, %v552
  %v560 = vsel %vm302, %v538, %v555
  %v561 = vld [vmem:[%s6 + $0x8] sm:$0xf]
  %v562 = vld [vmem:[%s7 + $0x8] sm:$0xf]
  %564 = vset.pattern.permute.xlu0 0
  %565 = vperm.xlu0 %564, %v562
  %v566 = vpop.permute.xlu0 %565
  %v569 = vsel %vm314, %v561, 0
  %v572 = vsel %vm302, %v544, 0
  %574 = vmatprep.subr.mxu0 0.0
  %575 = vmatpush1.msra.mxu0 %v557
  %576 = vmatprep.subr.mxu0 0.0
  %577 = vmatpush1.msra.mxu0 %v558
  %578 = vmatprep.subr.mxu0 0.0
  %579 = vmatpush1.msra.mxu0 %v559
  %580 = vmatprep.subr.mxu0 0.0
  %581 = vmatpush1.msra.mxu0 %v560
  %582 = vmatprep.subr.mxu0 0.0
  %583 = vmatpush1.msra.mxu0 %v572
  %584 = vmatprep.subr.mxu0 0.0
  %585 = vmatpush1.msra.mxu0 0.0
  %586 = vmatprep.subr.mxu0 0.0
  %587 = vmatpush1.msra.mxu0 0.0
  %588 = vmatprep.subr.mxu0 0.0
  %589 = vmatpush1.msra.mxu0 0.0
  %590 = vmatprep.subr.mxu0 0.0
  %591 = vmatpush1.msra.mxu0 0.0
  %592 = vmatprep.subr.mxu0 0.0
  %593 = vmatpush1.msra.mxu0 0.0
  %594 = vmatprep.subr.mxu0 0.0
  %595 = vmatpush1.msra.mxu0 0.0
  %596 = vmatprep.subr.mxu0 0.0
  %597 = vmatpush1.msra.mxu0 0.0
  %598 = vmatprep.subr.mxu0 0.0
  %599 = vmatpush1.msra.mxu0 0.0
  %600 = vmatprep.subr.mxu0 0.0
  %601 = vmatpush1.msra.mxu0 0.0
  %602 = vmatprep.subr.mxu0 0.0
  %603 = vmatpush1.msra.mxu0 0.0
  %604 = vmatprep.subr.mxu0 0.0
  %605 = vmatpush1.msra.mxu0 0.0
  %606 = vmatprep.subr.mxu0 0.0
  %607 = vmatpush1.msra.mxu0 0.0
  %608 = vmatprep.subr.mxu0 0.0
  %609 = vmatpush1.msra.mxu0 0.0
  %610 = vmatprep.subr.mxu0 0.0
  %611 = vmatpush1.msra.mxu0 0.0
  %612 = vmatprep.subr.mxu0 0.0
  %613 = vmatpush1.msra.mxu0 0.0
  %614 = vmatprep.subr.mxu0 0.0
  %615 = vmatpush1.msra.mxu0 0.0
  %616 = vmatprep.subr.mxu0 0.0
  %617 = vmatpush1.msra.mxu0 0.0
  %618 = vmatprep.subr.mxu0 0.0
  %619 = vmatpush1.msra.mxu0 0.0
  %620 = vmatprep.subr.mxu0 0.0
  %621 = vmatpush1.msra.mxu0 0.0
  %622 = vmatprep.subr.mxu0 0.0
  %623 = vmatpush1.msra.mxu0 0.0
  %624 = vmatprep.subr.mxu0 0.0
  %625 = vmatpush1.msra.mxu0 0.0
  %626 = vmatprep.subr.mxu0 0.0
  %627 = vmatpush1.msra.mxu0 0.0
  %628 = vmatprep.subr.mxu0 0.0
  %629 = vmatpush1.msra.mxu0 0.0
  %630 = vmatprep.subr.mxu0 0.0
  %631 = vmatpush1.msra.mxu0 0.0
  %632 = vmatprep.subr.mxu0 0.0
  %633 = vmatpush1.msra.mxu0 0.0
  %634 = vmatprep.subr.mxu0 0.0
  %635 = vmatpush1.msra.mxu0 0.0
  %636 = vmatprep.subr.mxu0 0.0
  %637 = vmatpush1.msra.mxu0 0.0
  %638 = vmatprep.mubr.f32.mxu0 0.0
  %639 = vmatmul.mubr.f32.gmra.mrb[0].mxu0 %v569
  %v640 = vpop.f32.mrb[0].mxu0
  %v641 = vadd.f32 %v566, %v640
  %v642 = vpop.f32.mrb[0].mxu0
  %643 = vdwg.mxu0
  %v644 = vmax.f32 %v641, 0.0
  %v646 = vrot.slane %v519, 4
  %v648 = vsel %vm302, %v391, %v646
  %v649 = vsel %vm302, %v644, %v225
  %v650 = vld [vmem:[%s4 + $0x10] sm:$0xff]
  %v651 = vld [vmem:[%s4 + $0x18] sm:$0xff]
  %v652 = vld [vmem:[%s5 + $0x10] sm:$0xff]
  %v653 = vld [vmem:[%s5 + $0x18] sm:$0xff]
  %655 = vset.pattern.permute.xlu0 0
  %656 = vperm.xlu0 %655, %v652
  %v657 = vpop.permute.xlu0 %656
  %660 = vset.pattern.permute.xlu0 0
  %661 = vperm.xlu0 %660, %v653
  %v662 = vpop.permute.xlu0 %661
  %v665 = vsel %vm45, %v650, 0
  %v668 = vsel %vm45, %v651, 0
  %670 = vmatprep.subr.mxu0 0.0
  %671 = vmatpush1.msra.mxu0 %v648
  %672 = vmatprep.subr.mxu0 0.0
  %673 = vmatpush1.msra.mxu0 %v649
  %674 = vmatprep.subr.mxu0 0.0
  %675 = vmatpush1.msra.mxu0 0.0
  %676 = vmatprep.subr.mxu0 0.0
  %677 = vmatpush1.msra.mxu0 0.0
  %678 = vmatprep.subr.mxu0 0.0
  %679 = vmatpush1.msra.mxu0 0.0
  %680 = vmatprep.subr.mxu0 0.0
  %681 = vmatpush1.msra.mxu0 0.0
  %682 = vmatprep.subr.mxu0 0.0
  %683 = vmatpush1.msra.mxu0 0.0
  %684 = vmatprep.subr.mxu0 0.0
  %685 = vmatpush1.msra.mxu0 0.0
  %686 = vmatprep.subr.mxu0 0.0
  %687 = vmatpush1.msra.mxu0 0.0
  %688 = vmatprep.subr.mxu0 0.0
  %689 = vmatpush1.msra.mxu0 0.0
  %690 = vmatprep.subr.mxu0 0.0
  %691 = vmatpush1.msra.mxu0 0.0
  %692 = vmatprep.subr.mxu0 0.0
  %693 = vmatpush1.msra.mxu0 0.0
  %694 = vmatprep.subr.mxu0 0.0
  %695 = vmatpush1.msra.mxu0 0.0
  %696 = vmatprep.subr.mxu0 0.0
  %697 = vmatpush1.msra.mxu0 0.0
  %698 = vmatprep.subr.mxu0 0.0
  %699 = vmatpush1.msra.mxu0 0.0
  %700 = vmatprep.subr.mxu0 0.0
  %701 = vmatpush1.msra.mxu0 0.0
  %702 = vmatprep.subr.mxu0 0.0
  %703 = vmatpush1.msra.mxu0 0.0
  %704 = vmatprep.subr.mxu0 0.0
  %705 = vmatpush1.msra.mxu0 0.0
  %706 = vmatprep.subr.mxu0 0.0
  %707 = vmatpush1.msra.mxu0 0.0
  %708 = vmatprep.subr.mxu0 0.0
  %709 = vmatpush1.msra.mxu0 0.0
  %710 = vmatprep.subr.mxu0 0.0
  %711 = vmatpush1.msra.mxu0 0.0
  %712 = vmatprep.subr.mxu0 0.0
  %713 = vmatpush1.msra.mxu0 0.0
  %714 = vmatprep.subr.mxu0 0.0
  %715 = vmatpush1.msra.mxu0 0.0
  %716 = vmatprep.subr.mxu0 0.0
  %717 = vmatpush1.msra.mxu0 0.0
  %718 = vmatprep.subr.mxu0 0.0
  %719 = vmatpush1.msra.mxu0 0.0
  %720 = vmatprep.subr.mxu0 0.0
  %721 = vmatpush1.msra.mxu0 0.0
  %722 = vmatprep.subr.mxu0 0.0
  %723 = vmatpush1.msra.mxu0 0.0
  %724 = vmatprep.subr.mxu0 0.0
  %725 = vmatpush1.msra.mxu0 0.0
  %726 = vmatprep.subr.mxu0 0.0
  %727 = vmatpush1.msra.mxu0 0.0
  %728 = vmatprep.subr.mxu0 0.0
  %729 = vmatpush1.msra.mxu0 0.0
  %730 = vmatprep.subr.mxu0 0.0
  %731 = vmatpush1.msra.mxu0 0.0
  %732 = vmatprep.subr.mxu0 0.0
  %733 = vmatpush1.msra.mxu0 0.0
  %734 = vmatprep.mubr.f32.mxu0 0.0
  %735 = vmatmul.mubr.f32.gmra.mrb[0].mxu0 %v665
  %v736 = vpop.f32.mrb[0].mxu0
  %v737 = vadd.f32 %v657, %v736
  %v738 = vpop.f32.mrb[0].mxu0
  %739 = vmatprep.mubr.f32.mxu0 0.0
  %740 = vmatmul.mubr.f32.gmra.mrb[0].mxu0 %v668
  %v741 = vpop.f32.mrb[0].mxu0
  %v742 = vadd.f32 %v662, %v741
  %v743 = vpop.f32.mrb[0].mxu0
  %744 = vdwg.mxu0
  %v745 = vmax.f32 %v737, 0.0
  %v746 = vmax.f32 %v742, 0.0
  %747 = vrot.lane.b32.xlu0 %v745, 9
  %v748 = vpop.permute.xlu0 %747
  %v749 = vmul.f32 %v748, %v232
  %750 = vrot.lane.b32.xlu0 %v745, 8
  %v751 = vpop.permute.xlu0 %750
  %v752 = vmul.f32 %v751, %v240
  %753 = vrot.lane.b32.xlu0 %v745, 7
  %v754 = vpop.permute.xlu0 %753
  %v755 = vmul.f32 %v754, %v248
  %756 = vrot.lane.b32.xlu0 %v745, 1
  %v757 = vpop.permute.xlu0 %756
  %v758 = vmul.f32 %v757, %v256
  %759 = vrot.lane.b32.xlu0 %v745, 127
  %v760 = vpop.permute.xlu0 %759
  %v761 = vmul.f32 %v760, %v264
  %762 = vrot.lane.b32.xlu0 %v745, 121
  %v763 = vpop.permute.xlu0 %762
  %v764 = vmul.f32 %v763, %v272
  %765 = vrot.lane.b32.xlu0 %v745, 120
  %v766 = vpop.permute.xlu0 %765
  %v767 = vmul.f32 %v766, %v280
  %768 = vrot.lane.b32.xlu0 %v745, 119
  %v769 = vpop.permute.xlu0 %768
  %v770 = vmul.f32 %v769, %v288
  %v772 = vrot.slane %v752, 4
  %v775 = vrot.slane %v758, 4
  %v778 = vrot.slane %v761, 4
  %v781 = vrot.slane %v767, 4
  %v783 = vsel %vm302, %v749, %v772
  %v784 = vsel %vm302, %v755, %v775
  %v785 = vsel %vm302, %v745, %v778
  %v786 = vsel %vm302, %v764, %v781
  %v787 = vld [vmem:[%s6 + $0xc] sm:$0xf]
  %v788 = vld [vmem:[%s7 + $0xc] sm:$0xf]
  %790 = vset.pattern.permute.xlu0 0
  %791 = vperm.xlu0 %790, %v788
  %v792 = vpop.permute.xlu0 %791
  %v795 = vsel %vm314, %v787, 0
  %v798 = vsel %vm302, %v770, 0
  %800 = vmatprep.subr.mxu0 0.0
  %801 = vmatpush1.msra.mxu0 %v783
  %802 = vmatprep.subr.mxu0 0.0
  %803 = vmatpush1.msra.mxu0 %v784
  %804 = vmatprep.subr.mxu0 0.0
  %805 = vmatpush1.msra.mxu0 %v785
  %806 = vmatprep.subr.mxu0 0.0
  %807 = vmatpush1.msra.mxu0 %v786
  %808 = vmatprep.subr.mxu0 0.0
  %809 = vmatpush1.msra.mxu0 %v798
  %810 = vmatprep.subr.mxu0 0.0
  %811 = vmatpush1.msra.mxu0 0.0
  %812 = vmatprep.subr.mxu0 0.0
  %813 = vmatpush1.msra.mxu0 0.0
  %814 = vmatprep.subr.mxu0 0.0
  %815 = vmatpush1.msra.mxu0 0.0
  %816 = vmatprep.subr.mxu0 0.0
  %817 = vmatpush1.msra.mxu0 0.0
  %818 = vmatprep.subr.mxu0 0.0
  %819 = vmatpush1.msra.mxu0 0.0
  %820 = vmatprep.subr.mxu0 0.0
  %821 = vmatpush1.msra.mxu0 0.0
  %822 = vmatprep.subr.mxu0 0.0
  %823 = vmatpush1.msra.mxu0 0.0
  %824 = vmatprep.subr.mxu0 0.0
  %825 = vmatpush1.msra.mxu0 0.0
  %826 = vmatprep.subr.mxu0 0.0
  %827 = vmatpush1.msra.mxu0 0.0
  %828 = vmatprep.subr.mxu0 0.0
  %829 = vmatpush1.msra.mxu0 0.0
  %830 = vmatprep.subr.mxu0 0.0
  %831 = vmatpush1.msra.mxu0 0.0
  %832 = vmatprep.subr.mxu0 0.0
  %833 = vmatpush1.msra.mxu0 0.0
  %834 = vmatprep.subr.mxu0 0.0
  %835 = vmatpush1.msra.mxu0 0.0
  %836 = vmatprep.subr.mxu0 0.0
  %837 = vmatpush1.msra.mxu0 0.0
  %838 = vmatprep.subr.mxu0 0.0
  %839 = vmatpush1.msra.mxu0 0.0
  %840 = vmatprep.subr.mxu0 0.0
  %841 = vmatpush1.msra.mxu0 0.0
  %842 = vmatprep.subr.mxu0 0.0
  %843 = vmatpush1.msra.mxu0 0.0
  %844 = vmatprep.subr.mxu0 0.0
  %845 = vmatpush1.msra.mxu0 0.0
  %846 = vmatprep.subr.mxu0 0.0
  %847 = vmatpush1.msra.mxu0 0.0
  %848 = vmatprep.subr.mxu0 0.0
  %849 = vmatpush1.msra.mxu0 0.0
  %850 = vmatprep.subr.mxu0 0.0
  %851 = vmatpush1.msra.mxu0 0.0
  %852 = vmatprep.subr.mxu0 0.0
  %853 = vmatpush1.msra.mxu0 0.0
  %854 = vmatprep.subr.mxu0 0.0
  %855 = vmatpush1.msra.mxu0 0.0
  %856 = vmatprep.subr.mxu0 0.0
  %857 = vmatpush1.msra.mxu0 0.0
  %858 = vmatprep.subr.mxu0 0.0
  %859 = vmatpush1.msra.mxu0 0.0
  %860 = vmatprep.subr.mxu0 0.0
  %861 = vmatpush1.msra.mxu0 0.0
  %862 = vmatprep.subr.mxu0 0.0
  %863 = vmatpush1.msra.mxu0 0.0
  %864 = vmatprep.mubr.f32.mxu0 0.0
  %865 = vmatmul.mubr.f32.gmra.mrb[0].mxu0 %v795
  %v866 = vpop.f32.mrb[0].mxu0
  %v867 = vadd.f32 %v792, %v866
  %v868 = vpop.f32.mrb[0].mxu0
  %869 = vdwg.mxu0
  %v870 = vmax.f32 %v867, 0.0
  %v872 = vrot.slane %v745, 4
  %v874 = vadd.f32 %v870, %v872
  %875 = vrot.lane.b32.xlu0 %v874, 9
  %v876 = vpop.permute.xlu0 %875
  %v877 = vmul.f32 %v876, %v232
  %878 = vrot.lane.b32.xlu0 %v874, 8
  %v879 = vpop.permute.xlu0 %878
  %v880 = vmul.f32 %v879, %v240
  %881 = vrot.lane.b32.xlu0 %v874, 7
  %v882 = vpop.permute.xlu0 %881
  %v883 = vmul.f32 %v882, %v248
  %884 = vrot.lane.b32.xlu0 %v874, 1
  %v885 = vpop.permute.xlu0 %884
  %v886 = vmul.f32 %v885, %v256
  %887 = vrot.lane.b32.xlu0 %v874, 127
  %v888 = vpop.permute.xlu0 %887
  %v889 = vmul.f32 %v888, %v264
  %890 = vrot.lane.b32.xlu0 %v874, 121
  %v891 = vpop.permute.xlu0 %890
  %v892 = vmul.f32 %v891, %v272
  %893 = vrot.lane.b32.xlu0 %v874, 120
  %v894 = vpop.permute.xlu0 %893
  %v895 = vmul.f32 %v894, %v280
  %896 = vrot.lane.b32.xlu0 %v874, 119
  %v897 = vpop.permute.xlu0 %896
  %v898 = vmul.f32 %v897, %v288
  %v900 = vrot.slane %v880, 4
  %v903 = vrot.slane %v886, 4
  %v906 = vrot.slane %v889, 4
  %v909 = vrot.slane %v895, 4
  %v911 = vsel %vm302, %v877, %v900
  %v912 = vsel %vm302, %v883, %v903
  %v913 = vsel %vm302, %v874, %v906
  %v914 = vsel %vm302, %v892, %v909
  %v915 = vld [vmem:[%s6 + $0x10] sm:$0xf]
  %v916 = vld [vmem:[%s7 + $0x10] sm:$0xf]
  %918 = vset.pattern.permute.xlu0 0
  %919 = vperm.xlu0 %918, %v916
  %v920 = vpop.permute.xlu0 %919
  %v923 = vsel %vm314, %v915, 0
  %v926 = vsel %vm302, %v898, 0
  %928 = vmatprep.subr.mxu0 0.0
  %929 = vmatpush1.msra.mxu0 %v911
  %930 = vmatprep.subr.mxu0 0.0
  %931 = vmatpush1.msra.mxu0 %v912
  %932 = vmatprep.subr.mxu0 0.0
  %933 = vmatpush1.msra.mxu0 %v913
  %934 = vmatprep.subr.mxu0 0.0
  %935 = vmatpush1.msra.mxu0 %v914
  %936 = vmatprep.subr.mxu0 0.0
  %937 = vmatpush1.msra.mxu0 %v926
  %938 = vmatprep.subr.mxu0 0.0
  %939 = vmatpush1.msra.mxu0 0.0
  %940 = vmatprep.subr.mxu0 0.0
  %941 = vmatpush1.msra.mxu0 0.0
  %942 = vmatprep.subr.mxu0 0.0
  %943 = vmatpush1.msra.mxu0 0.0
  %944 = vmatprep.subr.mxu0 0.0
  %945 = vmatpush1.msra.mxu0 0.0
  %946 = vmatprep.subr.mxu0 0.0
  %947 = vmatpush1.msra.mxu0 0.0
  %948 = vmatprep.subr.mxu0 0.0
  %949 = vmatpush1.msra.mxu0 0.0
  %950 = vmatprep.subr.mxu0 0.0
  %951 = vmatpush1.msra.mxu0 0.0
  %952 = vmatprep.subr.mxu0 0.0
  %953 = vmatpush1.msra.mxu0 0.0
  %954 = vmatprep.subr.mxu0 0.0
  %955 = vmatpush1.msra.mxu0 0.0
  %956 = vmatprep.subr.mxu0 0.0
  %957 = vmatpush1.msra.mxu0 0.0
  %958 = vmatprep.subr.mxu0 0.0
  %959 = vmatpush1.msra.mxu0 0.0
  %960 = vmatprep.subr.mxu0 0.0
  %961 = vmatpush1.msra.mxu0 0.0
  %962 = vmatprep.subr.mxu0 0.0
  %963 = vmatpush1.msra.mxu0 0.0
  %964 = vmatprep.subr.mxu0 0.0
  %965 = vmatpush1.msra.mxu0 0.0
  %966 = vmatprep.subr.mxu0 0.0
  %967 = vmatpush1.msra.mxu0 0.0
  %968 = vmatprep.subr.mxu0 0.0
  %969 = vmatpush1.msra.mxu0 0.0
  %970 = vmatprep.subr.mxu0 0.0
  %971 = vmatpush1.msra.mxu0 0.0
  %972 = vmatprep.subr.mxu0 0.0
  %973 = vmatpush1.msra.mxu0 0.0
  %974 = vmatprep.subr.mxu0 0.0
  %975 = vmatpush1.msra.mxu0 0.0
  %976 = vmatprep.subr.mxu0 0.0
  %977 = vmatpush1.msra.mxu0 0.0
  %978 = vmatprep.subr.mxu0 0.0
  %979 = vmatpush1.msra.mxu0 0.0
  %980 = vmatprep.subr.mxu0 0.0
  %981 = vmatpush1.msra.mxu0 0.0
  %982 = vmatprep.subr.mxu0 0.0
  %983 = vmatpush1.msra.mxu0 0.0
  %984 = vmatprep.subr.mxu0 0.0
  %985 = vmatpush1.msra.mxu0 0.0
  %986 = vmatprep.subr.mxu0 0.0
  %987 = vmatpush1.msra.mxu0 0.0
  %988 = vmatprep.subr.mxu0 0.0
  %989 = vmatpush1.msra.mxu0 0.0
  %990 = vmatprep.subr.mxu0 0.0
  %991 = vmatpush1.msra.mxu0 0.0
  %992 = vmatprep.mubr.f32.mxu0 0.0
  %993 = vmatmul.mubr.f32.gmra.mrb[0].mxu0 %v923
  %v994 = vpop.f32.mrb[0].mxu0
  %v995 = vadd.f32 %v920, %v994
  %v996 = vpop.f32.mrb[0].mxu0
  %997 = vdwg.mxu0
  %v998 = vmax.f32 %v995, 0.0
  %v999 = vadd.f32 %v998, %v746
  %1000 = vrot.lane.b32.xlu0 %v999, 9
  %v1001 = vpop.permute.xlu0 %1000
  %v1002 = vmul.f32 %v1001, %v232
  %1003 = vrot.lane.b32.xlu0 %v999, 8
  %v1004 = vpop.permute.xlu0 %1003
  %v1005 = vmul.f32 %v1004, %v240
  %1006 = vrot.lane.b32.xlu0 %v999, 7
  %v1007 = vpop.permute.xlu0 %1006
  %v1008 = vmul.f32 %v1007, %v248
  %1009 = vrot.lane.b32.xlu0 %v999, 1
  %v1010 = vpop.permute.xlu0 %1009
  %v1011 = vmul.f32 %v1010, %v256
  %1012 = vrot.lane.b32.xlu0 %v999, 127
  %v1013 = vpop.permute.xlu0 %1012
  %v1014 = vmul.f32 %v1013, %v264
  %1015 = vrot.lane.b32.xlu0 %v999, 121
  %v1016 = vpop.permute.xlu0 %1015
  %v1017 = vmul.f32 %v1016, %v272
  %1018 = vrot.lane.b32.xlu0 %v999, 120
  %v1019 = vpop.permute.xlu0 %1018
  %v1020 = vmul.f32 %v1019, %v280
  %1021 = vrot.lane.b32.xlu0 %v999, 119
  %v1022 = vpop.permute.xlu0 %1021
  %v1023 = vmul.f32 %v1022, %v288
  %v1025 = vrot.slane %v1005, 4
  %v1028 = vrot.slane %v1011, 4
  %v1031 = vrot.slane %v1014, 4
  %v1034 = vrot.slane %v1020, 4
  %v1036 = vsel %vm302, %v1002, %v1025
  %v1037 = vsel %vm302, %v1008, %v1028
  %v1038 = vsel %vm302, %v999, %v1031
  %v1039 = vsel %vm302, %v1017, %v1034
  %v1040 = vld [vmem:[%s6 + $0x14] sm:$0xf]
  %v1041 = vld [vmem:[%s7 + $0x14] sm:$0xf]
  %1043 = vset.pattern.permute.xlu0 0
  %1044 = vperm.xlu0 %1043, %v1041
  %v1045 = vpop.permute.xlu0 %1044
  %v1048 = vsel %vm314, %v1040, 0
  %v1051 = vsel %vm302, %v1023, 0
  %1053 = vmatprep.subr.mxu0 0.0
  %1054 = vmatpush1.msra.mxu0 %v1036
  %1055 = vmatprep.subr.mxu0 0.0
  %1056 = vmatpush1.msra.mxu0 %v1037
  %1057 = vmatprep.subr.mxu0 0.0
  %1058 = vmatpush1.msra.mxu0 %v1038
  %1059 = vmatprep.subr.mxu0 0.0
  %1060 = vmatpush1.msra.mxu0 %v1039
  %1061 = vmatprep.subr.mxu0 0.0
  %1062 = vmatpush1.msra.mxu0 %v1051
  %1063 = vmatprep.subr.mxu0 0.0
  %1064 = vmatpush1.msra.mxu0 0.0
  %1065 = vmatprep.subr.mxu0 0.0
  %1066 = vmatpush1.msra.mxu0 0.0
  %1067 = vmatprep.subr.mxu0 0.0
  %1068 = vmatpush1.msra.mxu0 0.0
  %1069 = vmatprep.subr.mxu0 0.0
  %1070 = vmatpush1.msra.mxu0 0.0
  %1071 = vmatprep.subr.mxu0 0.0
  %1072 = vmatpush1.msra.mxu0 0.0
  %1073 = vmatprep.subr.mxu0 0.0
  %1074 = vmatpush1.msra.mxu0 0.0
  %1075 = vmatprep.subr.mxu0 0.0
  %1076 = vmatpush1.msra.mxu0 0.0
  %1077 = vmatprep.subr.mxu0 0.0
  %1078 = vmatpush1.msra.mxu0 0.0
  %1079 = vmatprep.subr.mxu0 0.0
  %1080 = vmatpush1.msra.mxu0 0.0
  %1081 = vmatprep.subr.mxu0 0.0
  %1082 = vmatpush1.msra.mxu0 0.0
  %1083 = vmatprep.subr.mxu0 0.0
  %1084 = vmatpush1.msra.mxu0 0.0
  %1085 = vmatprep.subr.mxu0 0.0
  %1086 = vmatpush1.msra.mxu0 0.0
  %1087 = vmatprep.subr.mxu0 0.0
  %1088 = vmatpush1.msra.mxu0 0.0
  %1089 = vmatprep.subr.mxu0 0.0
  %1090 = vmatpush1.msra.mxu0 0.0
  %1091 = vmatprep.subr.mxu0 0.0
  %1092 = vmatpush1.msra.mxu0 0.0
  %1093 = vmatprep.subr.mxu0 0.0
  %1094 = vmatpush1.msra.mxu0 0.0
  %1095 = vmatprep.subr.mxu0 0.0
  %1096 = vmatpush1.msra.mxu0 0.0
  %1097 = vmatprep.subr.mxu0 0.0
  %1098 = vmatpush1.msra.mxu0 0.0
  %1099 = vmatprep.subr.mxu0 0.0
  %1100 = vmatpush1.msra.mxu0 0.0
  %1101 = vmatprep.subr.mxu0 0.0
  %1102 = vmatpush1.msra.mxu0 0.0
  %1103 = vmatprep.subr.mxu0 0.0
  %1104 = vmatpush1.msra.mxu0 0.0
  %1105 = vmatprep.subr.mxu0 0.0
  %1106 = vmatpush1.msra.mxu0 0.0
  %1107 = vmatprep.subr.mxu0 0.0
  %1108 = vmatpush1.msra.mxu0 0.0
  %1109 = vmatprep.subr.mxu0 0.0
  %1110 = vmatpush1.msra.mxu0 0.0
  %1111 = vmatprep.subr.mxu0 0.0
  %1112 = vmatpush1.msra.mxu0 0.0
  %1113 = vmatprep.subr.mxu0 0.0
  %1114 = vmatpush1.msra.mxu0 0.0
  %1115 = vmatprep.subr.mxu0 0.0
  %1116 = vmatpush1.msra.mxu0 0.0
  %1117 = vmatprep.mubr.f32.mxu0 0.0
  %1118 = vmatmul.mubr.f32.gmra.mrb[0].mxu0 %v1048
  %v1119 = vpop.f32.mrb[0].mxu0
  %v1120 = vadd.f32 %v1045, %v1119
  %v1121 = vpop.f32.mrb[0].mxu0
  %1122 = vdwg.mxu0
  %v1123 = vmax.f32 %v1120, 0.0
  %v1125 = vrot.slane %v998, 4
  %v1127 = vsel %vm302, %v870, %v1125
  %v1128 = vsel %vm302, %v1123, %v746
  %1129 = vst [vmem:[%s8] sm:$0xff] %v1127
  %1130 = vst [vmem:[%s8 + $0x8] sm:$0xff] %v1128
  // Predicated region
  $region34: #{_lambda_.1} parent=0 // pred_check
    _
  $region35: #{_lambda_.1} parent=0 // pred_check_branch
    %1132 = sbr.rel (0) target = $region37
  $region36: #{_lambda_.1} parent=0 // pred_region
    _
  $region37: #{_lambda_.1} parent=0 // pred_fallthru
    _
  // Predicated region
  $region38: #{_lambda_.1} parent=0 // pred_check
    _
  $region39: #{_lambda_.1} parent=0 // pred_check_branch
    %1134 = sbr.rel (0) target = $region41
  $region40: #{_lambda_.1} parent=0 // pred_region
    _
  $region41: #{_lambda_.1} parent=0 // pred_fallthru
    _

</llo_original>
